<compile_context>
chip_gen: v6e
topology: v6e:2x2x1
jax: 0.10.0
libtpu: 0.0.40
codegen_flags: <defaults>
</compile_context>

<pallas_src>
import functools

import jax
import jax.numpy as jnp
import numpy as np
from jax.experimental import pallas as pl
from jax.experimental.pallas import tpu as pltpu


def _round_up(x, m):
    return ((x + m - 1) // m) * m


def _conv_kernel(x_ref, w_ref, b_ref, o_ref, *, tile_h, w_out, k, dil_h, dil_w):
    """One (batch, H-row-tile) step of the dilated valid conv.

    x_ref : (1, tile_h + dil_h*(k-1), Wp, C_in)   halo'd input rows   (VMEM)
    w_ref : (k*k*C_in, C_out_p)                    weight-normed taps  (VMEM)
    b_ref : (1, C_out_p)                           bias (zero-padded)  (VMEM)
    o_ref : (1, tile_h, w_out, C_out_p)            output tile         (VMEM)
    """
    # im2col: gather the k*k dilated taps once.  Contraction ordering is
    # (kh slowest, then kw, then c_in) and MUST match the wrapper's
    # transpose(w, (2, 3, 1, 0)).reshape(k*k*C_in, C_out).
    taps = []
    for kh in range(k):
        for kw in range(k):
            h0 = kh * dil_h
            w0 = kw * dil_w
            taps.append(x_ref[0, h0:h0 + tile_h, w0:w0 + w_out, :])
    patch = jnp.concatenate(taps, axis=-1)                # (tile_h, w_out, k*k*C_in)
    patch = patch.reshape(tile_h * w_out, patch.shape[-1])

    # Single fused MXU matmul over the full k*k*C_in contraction, f32 accum,
    # bias folded into the epilogue.  Output lane dim (C_out_p) is a multiple
    # of 128, so the store below is unmasked / lane-dense.
    acc = jnp.dot(patch, w_ref[...], preferred_element_type=jnp.float32)
    acc = acc + b_ref[...]
    o_ref[0] = acc.reshape(tile_h, w_out, -1).astype(o_ref.dtype)


def _pick_tile_h(h_out, wp, w_out, c_in, c_out_p, k, halo_h, itemsize,
                 budget_bytes=6 * 1024 * 1024):
    """Largest H row-tile (a divisor of h_out) whose working set fits the budget.

    Budget is deliberately small (~6 MiB) so that double-buffered input/output
    blocks + the f32 im2col patch + accumulator stay well inside v7x's 32 MiB
    default scoped VMEM (64 MiB physical)."""
    def vmem_bytes(th):
        x_blk = 2 * (th + halo_h) * wp * c_in * itemsize        # double-buffered in
        out_blk = 2 * th * w_out * c_out_p * itemsize           # double-buffered out
        patch = th * w_out * k * k * c_in * 4                   # f32 im2col
        acc = th * w_out * c_out_p * 4                          # f32 matmul result
        return x_blk + out_blk + patch + acc

    cands = [d for d in range(1, h_out + 1)
             if h_out % d == 0 and (d == h_out or d % 8 == 0)]
    fitting = [d for d in cands if vmem_bytes(d) <= budget_bytes]
    return max(fitting) if fitting else min(cands)


def wn_conv2d_causal(x_nchw, v, g, bias, *, dilation_h=1, dilation_w=1, causal=True):
    """Forward pass of the PyTorch `Conv2D` module.

    x_nchw: (N, C_in, H, W); v: (C_out, C_in, K, K); g: (C_out, 1, 1, 1);
    bias: (C_out,).  Returns (N, C_out, H_out, W_out) (== (N, C_out, H, W) for
    the default K=3, dilation=1 configuration)."""
    c_out, c_in, k, _ = v.shape
    n = x_nchw.shape[0]
    dtype = x_nchw.dtype
    itemsize = jnp.dtype(dtype).itemsize

    # --- weight normalization (dim=0): parameter glue, plain JAX ---
    norm = jnp.sqrt(jnp.sum(jnp.square(v.astype(jnp.float32)),
                            axis=(1, 2, 3), keepdims=True))
    wn = (g.astype(jnp.float32) * v.astype(jnp.float32) / norm).astype(dtype)

    # --- causal/symmetric padding folded into the input (causal trim becomes
    #     "pad H on top only"), so the kernel runs a valid dilated conv ---
    if causal:
        pad_top, pad_bot = dilation_h * (k - 1), 0
    else:
        pad_top = pad_bot = dilation_h * (k - 1) // 2
    pad_w = dilation_w * (k - 1) // 2

    x_nhwc = jnp.transpose(x_nchw, (0, 2, 3, 1))                  # NCHW -> NHWC
    x_pad = jnp.pad(x_nhwc, ((0, 0), (pad_top, pad_bot), (pad_w, pad_w), (0, 0)))
    _, hp, wp, _ = x_pad.shape
    halo_h = dilation_h * (k - 1)
    h_out = hp - halo_h
    w_out = wp - dilation_w * (k - 1)

    # --- lane-dense output channels ---
    c_out_p = _round_up(c_out, 128)

    # Weight as one (kh*kw*c_in, c_out_p) matrix for the fused matmul.
    w_mat = jnp.transpose(wn, (2, 3, 1, 0)).reshape(k * k * c_in, c_out)
    w_mat = jnp.pad(w_mat, ((0, 0), (0, c_out_p - c_out)))
    b_pad = jnp.pad(bias.astype(dtype), (0, c_out_p - c_out)).reshape(1, c_out_p)

    tile_h = _pick_tile_h(h_out, wp, w_out, c_in, c_out_p, k, halo_h, itemsize)
    n_h_tiles = h_out // tile_h

    if n_h_tiles == 1:
        # Single row tile: plain blocked indexing over the full padded height.
        x_spec = pl.BlockSpec((1, hp, wp, c_in), lambda b, t: (b, 0, 0, 0))
    else:
        # Overlapping halo'd row tiles: element-offset indexing along H.
        x_spec = pl.BlockSpec(
            (1, pl.Element(tile_h + halo_h), wp, c_in),
            lambda b, t: (b, t * tile_h, 0, 0))

    kernel = functools.partial(
        _conv_kernel, tile_h=tile_h, w_out=w_out, k=k,
        dil_h=dilation_h, dil_w=dilation_w)

    flops = 2 * n * h_out * w_out * k * k * c_in * c_out
    bytes_accessed = ((x_pad.size + w_mat.size + b_pad.size) * itemsize
                      + n * h_out * w_out * c_out_p * itemsize)

    out = pl.pallas_call(
        kernel,
        out_shape=jax.ShapeDtypeStruct((n, h_out, w_out, c_out_p), dtype),
        grid=(n, n_h_tiles),
        in_specs=[
            x_spec,
            pl.BlockSpec((k * k * c_in, c_out_p), lambda b, t: (0, 0)),
            pl.BlockSpec((1, c_out_p), lambda b, t: (0, 0)),
        ],
        out_specs=pl.BlockSpec((1, tile_h, w_out, c_out_p),
                               lambda b, t: (b, t, 0, 0)),
        compiler_params=pltpu.CompilerParams(
            dimension_semantics=("parallel", "parallel")),
        cost_estimate=pl.CostEstimate(
            flops=flops, transcendentals=0, bytes_accessed=bytes_accessed),
    )(x_pad, w_mat, b_pad)

    out = out[..., :c_out]                        # drop lane padding
    return jnp.transpose(out, (0, 3, 1, 2))       # NHWC -> NCHW


def _reference(x_nchw, v, g, bias, *, dilation_h=1, dilation_w=1, causal=True):
    """Plain-JAX replica of the PyTorch module's forward()."""
    k = v.shape[-1]
    ph = dilation_h * (k - 1) if causal else dilation_h * (k - 1) // 2
    pw = dilation_w * (k - 1) // 2
    norm = jnp.sqrt(jnp.sum(v ** 2, axis=(1, 2, 3), keepdims=True))
    w = g * v / norm
    y = jax.lax.conv_general_dilated(
        x_nchw, w, window_strides=(1, 1),
        padding=[(ph, ph), (pw, pw)],
        rhs_dilation=(dilation_h, dilation_w),
        dimension_numbers=("NCHW", "OIHW", "NCHW"))
    y = y + bias.reshape(1, -1, 1, 1)
    if causal and ph > 0:
        y = y[:, :, :-ph, :]
    return y


if __name__ == "__main__":
    # Conv2D(in_channels=4, out_channels=8, kernel_size=3, dilation=(1,1), causal=True)
    N, C_in, H, W = 2, 4, 16, 16
    C_out, K = 8, 3
    dil_h = dil_w = 1
    causal = True

    key = jax.random.PRNGKey(0)
    kx, kv, kg, kb = jax.random.split(key, 4)
    x = jax.random.normal(kx, (N, C_in, H, W), dtype=jnp.float32)
    v = jax.random.normal(kv, (C_out, C_in, K, K), dtype=jnp.float32) * 0.1
    g = jax.random.uniform(kg, (C_out, 1, 1, 1), dtype=jnp.float32,
                           minval=0.5, maxval=1.5)
    b = jax.random.normal(kb, (C_out,), dtype=jnp.float32) * 0.1

    y = jax.block_until_ready(
        wn_conv2d_causal(x, v, g, b, dilation_h=dil_h, dilation_w=dil_w, causal=causal))
    y_ref = jax.block_until_ready(
        _reference(x, v, g, b, dilation_h=dil_h, dilation_w=dil_w, causal=causal))

    assert y.shape == (N, C_out, H, W), y.shape
    np.testing.assert_allclose(np.asarray(y), np.asarray(y_ref), rtol=1e-4, atol=1e-4)
    print("KERNEL_OK")
</pallas_src>

<mosaic_0001>
module attributes {stable_mosaic.version = 11 : i64} {
  func.func @_conv_kernel(%arg0: i32, %arg1: i32, %arg2: memref<1x18x18x4xf32, #tpu.memory_space<vmem>>, %arg3: memref<36x128xf32, #tpu.memory_space<vmem>>, %arg4: memref<1x128xf32, #tpu.memory_space<vmem>>, %arg5: memref<1x16x16x128xf32, #tpu.memory_space<vmem>>) attributes {dimension_semantics = [#tpu.dimension_semantics<parallel>, #tpu.dimension_semantics<parallel>], iteration_bounds = array<i64: 2, 1>, scalar_prefetch = 0 : i64, scratch_operands = 0 : i64, tpu.core_type = #tpu.core_type<tc>, window_params = [{transform_indices = @transform_0, window_bounds = array<i64: 1, 18, 18, 4>}, {pipeline_mode = #tpu.pipeline_mode<synchronous>, transform_indices = @transform_1, window_bounds = array<i64: 36, 128>}, {pipeline_mode = #tpu.pipeline_mode<synchronous>, transform_indices = @transform_2, window_bounds = array<i64: 1, 128>}, {transform_indices = @transform_3, window_bounds = array<i64: 1, 16, 16, 128>}]} {
    %c0 = arith.constant 0 : index
    %c0_0 = arith.constant 0 : index
    %c0_1 = arith.constant 0 : index
    %c0_2 = arith.constant 0 : index
    %0 = vector.load %arg2[%c0, %c0_0, %c0_1, %c0_2] : memref<1x18x18x4xf32, #tpu.memory_space<vmem>>, vector<1x16x16x4xf32>
    %1 = vector.shape_cast %0 : vector<1x16x16x4xf32> to vector<16x16x4xf32>
    %c0_3 = arith.constant 0 : index
    %c0_4 = arith.constant 0 : index
    %c1 = arith.constant 1 : index
    %c0_5 = arith.constant 0 : index
    %2 = vector.load %arg2[%c0_3, %c0_4, %c1, %c0_5] : memref<1x18x18x4xf32, #tpu.memory_space<vmem>>, vector<1x16x16x4xf32>
    %3 = vector.shape_cast %2 : vector<1x16x16x4xf32> to vector<16x16x4xf32>
    %c0_6 = arith.constant 0 : index
    %c0_7 = arith.constant 0 : index
    %c2 = arith.constant 2 : index
    %c0_8 = arith.constant 0 : index
    %4 = vector.load %arg2[%c0_6, %c0_7, %c2, %c0_8] : memref<1x18x18x4xf32, #tpu.memory_space<vmem>>, vector<1x16x16x4xf32>
    %5 = vector.shape_cast %4 : vector<1x16x16x4xf32> to vector<16x16x4xf32>
    %c0_9 = arith.constant 0 : index
    %c1_10 = arith.constant 1 : index
    %c0_11 = arith.constant 0 : index
    %c0_12 = arith.constant 0 : index
    %6 = vector.load %arg2[%c0_9, %c1_10, %c0_11, %c0_12] : memref<1x18x18x4xf32, #tpu.memory_space<vmem>>, vector<1x16x16x4xf32>
    %7 = vector.shape_cast %6 : vector<1x16x16x4xf32> to vector<16x16x4xf32>
    %c0_13 = arith.constant 0 : index
    %c1_14 = arith.constant 1 : index
    %c1_15 = arith.constant 1 : index
    %c0_16 = arith.constant 0 : index
    %8 = vector.load %arg2[%c0_13, %c1_14, %c1_15, %c0_16] : memref<1x18x18x4xf32, #tpu.memory_space<vmem>>, vector<1x16x16x4xf32>
    %9 = vector.shape_cast %8 : vector<1x16x16x4xf32> to vector<16x16x4xf32>
    %c0_17 = arith.constant 0 : index
    %c1_18 = arith.constant 1 : index
    %c2_19 = arith.constant 2 : index
    %c0_20 = arith.constant 0 : index
    %10 = vector.load %arg2[%c0_17, %c1_18, %c2_19, %c0_20] : memref<1x18x18x4xf32, #tpu.memory_space<vmem>>, vector<1x16x16x4xf32>
    %11 = vector.shape_cast %10 : vector<1x16x16x4xf32> to vector<16x16x4xf32>
    %c0_21 = arith.constant 0 : index
    %c2_22 = arith.constant 2 : index
    %c0_23 = arith.constant 0 : index
    %c0_24 = arith.constant 0 : index
    %12 = vector.load %arg2[%c0_21, %c2_22, %c0_23, %c0_24] : memref<1x18x18x4xf32, #tpu.memory_space<vmem>>, vector<1x16x16x4xf32>
    %13 = vector.shape_cast %12 : vector<1x16x16x4xf32> to vector<16x16x4xf32>
    %c0_25 = arith.constant 0 : index
    %c2_26 = arith.constant 2 : index
    %c1_27 = arith.constant 1 : index
    %c0_28 = arith.constant 0 : index
    %14 = vector.load %arg2[%c0_25, %c2_26, %c1_27, %c0_28] : memref<1x18x18x4xf32, #tpu.memory_space<vmem>>, vector<1x16x16x4xf32>
    %15 = vector.shape_cast %14 : vector<1x16x16x4xf32> to vector<16x16x4xf32>
    %c0_29 = arith.constant 0 : index
    %c2_30 = arith.constant 2 : index
    %c2_31 = arith.constant 2 : index
    %c0_32 = arith.constant 0 : index
    %16 = vector.load %arg2[%c0_29, %c2_30, %c2_31, %c0_32] : memref<1x18x18x4xf32, #tpu.memory_space<vmem>>, vector<1x16x16x4xf32>
    %17 = vector.shape_cast %16 : vector<1x16x16x4xf32> to vector<16x16x4xf32>
    %18 = tpu.concatenate %1, %3, %5, %7, %9, %11, %13, %15, %17 in 2 : vector<16x16x4xf32>, vector<16x16x4xf32>, vector<16x16x4xf32>, vector<16x16x4xf32>, vector<16x16x4xf32>, vector<16x16x4xf32>, vector<16x16x4xf32>, vector<16x16x4xf32>, vector<16x16x4xf32> -> vector<16x16x36xf32>
    %19 = vector.shape_cast %18 : vector<16x16x36xf32> to vector<256x36xf32>
    %c0_33 = arith.constant 0 : index
    %c0_34 = arith.constant 0 : index
    %20 = vector.load %arg3[%c0_33, %c0_34] : memref<36x128xf32, #tpu.memory_space<vmem>>, vector<36x128xf32>
    %cst = arith.constant dense<0.000000e+00> : vector<256x128xf32>
    %21 = tpu.matmul %19, %20, %cst {dimension_numbers = #tpu.dot_dimension_numbers<[1], [0], [0], [1], [0, 0, 1, 1], [], []>} : vector<256x36xf32>, vector<36x128xf32>, vector<256x128xf32> -> vector<256x128xf32>
    %c0_35 = arith.constant 0 : index
    %c0_36 = arith.constant 0 : index
    %22 = vector.load %arg4[%c0_35, %c0_36] : memref<1x128xf32, #tpu.memory_space<vmem>>, vector<1x128xf32>
    %23 = vector.broadcast %22 : vector<1x128xf32> to vector<256x128xf32>
    %24 = arith.addf %21, %23 : vector<256x128xf32>
    %25 = vector.shape_cast %24 : vector<256x128xf32> to vector<16x16x128xf32>
    %c0_37 = arith.constant 0 : index
    %c0_38 = arith.constant 0 : index
    %c0_39 = arith.constant 0 : index
    %c0_40 = arith.constant 0 : index
    %26 = vector.load %arg5[%c0_37, %c0_38, %c0_39, %c0_40] : memref<1x16x16x128xf32, #tpu.memory_space<vmem>>, vector<1x16x16x128xf32>
    %27 = vector.shape_cast %26 : vector<1x16x16x128xf32> to vector<16x16x128xf32>
    %28 = vector.shape_cast %25 : vector<16x16x128xf32> to vector<1x16x16x128xf32>
    tpu.vector_store %arg5[%c0_37, %c0_38, %c0_39, %c0_40], %28 {strides = array<i32>} : memref<1x16x16x128xf32, #tpu.memory_space<vmem>>, vector<1x16x16x128xf32>,
    return
  }
  func.func @transform_0(%arg0: i32, %arg1: i32) -> (i32, i32, i32, i32) {
    %c0_i32 = arith.constant 0 : i32
    %c0_i32_0 = arith.constant 0 : i32
    %c0_i32_1 = arith.constant 0 : i32
    %c0_i32_2 = arith.constant 0 : i32
    return %arg0, %c0_i32, %c0_i32_0, %c0_i32_1 : i32, i32, i32, i32
  }
  func.func @transform_1(%arg0: i32, %arg1: i32) -> (i32, i32) {
    %c0_i32 = arith.constant 0 : i32
    %c0_i32_0 = arith.constant 0 : i32
    %c0_i32_1 = arith.constant 0 : i32
    return %c0_i32, %c0_i32_0 : i32, i32
  }
  func.func @transform_2(%arg0: i32, %arg1: i32) -> (i32, i32) {
    %c0_i32 = arith.constant 0 : i32
    %c0_i32_0 = arith.constant 0 : i32
    %c0_i32_1 = arith.constant 0 : i32
    return %c0_i32, %c0_i32_0 : i32, i32
  }
  func.func @transform_3(%arg0: i32, %arg1: i32) -> (i32, i32, i32, i32) {
    %c0_i32 = arith.constant 0 : i32
    %c0_i32_0 = arith.constant 0 : i32
    %c0_i32_1 = arith.constant 0 : i32
    return %arg0, %arg1, %c0_i32, %c0_i32_0 : i32, i32, i32, i32
  }
}

</mosaic_0001>

<llo_original>
// kernel: tpu_custom_call.1
$region0: #{tpu_custom_call.1}
  #allocation0 [shape = 'u32[]', space=smem, size = 0x4, offset = 0x4, fixed_abs, tag = 'smem constant byte address 0x4 - core index']
  #allocation1 [shape = 'u32[144,128]{1,0:T(1,128)}', space=vmem, size = 0x12000, scoped, tag = 'internal scratch']
  %s0 = inlined_call_operand.vmem [shape: f32[2,18,18,4], index: 0, kind: input, shape index: {}]
  %s1 = inlined_call_operand.vmem [shape: f32[36,128], index: 1, kind: input, shape index: {}]
  %s2 = inlined_call_operand.vmem [shape: f32[1,128], index: 2, kind: input, shape index: {}]
  %s3 = inlined_call_operand.hbm [shape: f32[2,16,16,128], index: 3, kind: output, shape index: {}]
  %s4 = sld [smem:[#allocation0]]
  $region45: #{tpu_custom_call.1} parent=0
    _
  %s6 = ssub.s32 1, %s4
  %s7 = scalar_select 0, %s6, %s4
  $region1: #{tpu_custom_call.1} parent=0
    #allocation2 [shape = 'u8[262144]{0}', space=vmem, size = 0x40000, scoped, tag = 'output window, operand 0']
    #allocation3 [shape = 's32[2]{0}', space=sflag, size = 0x8, scoped, tag = 'scoped memory for tpu_custom_call.1']
    %8 = vsyncpa [#allocation3], 0
    %s9 = scalar_lea.sflag [#allocation3], 1
    %10 = vsyncpa %s9, 0
    loop: start=0, step=1, limit=4
    $region2: #{tpu_custom_call.1} parent=1 // loop_pre_header
      _
    $region3: #{tpu_custom_call.1} parent=1 // loop_header
      %s12 = sphi 0, %s16
      %p13 = scmp.ge.s32.totalorder %s12, 4
      %s19 = sphi 0, %s31
      %s20 = sphi 0, %s27
      %s21 = sphi 0, %s19
      %s22 = sphi 0, %s20
      %s23 = sphi 0, %s21
      %s24 = sphi 0, %s22
      %s34 = sphi 0, %s36
      %s37 = sphi 0, %s34
      %s38 = sphi 0, %s37
      %s54 = sphi 0, %s38
      %s58 = sphi 0, %s58
      %s60 = sphi 0, %s58
      %s61 = sphi 0, %s60
      %s75 = sphi 0, %s61
      %s79 = sphi 0, %s79
      %s81 = sphi 0, %s79
      %s82 = sphi 0, %s81
      %s96 = sphi 0, %s82
      %s104 = sphi 0, %s106
      %s107 = sphi 0, %s104
      %s108 = sphi 0, %s107
      %s124 = sphi 0, %s108
    $region4: #{tpu_custom_call.1} parent=1 // loop_header_branch
      %15 = sbr.rel (%p13) target = $region8
    $region5: #{tpu_custom_call.1} parent=1 // loop_body
      %s17 = ssub.s32 %s12, 1
      %s18 = ssub.s32 %s12, 2
      %s25 = sadd.s32 1, %s20
      %p26 = scmp.ge.s32.totalorder %s25, 1
      %s27 = scalar_select %p26, 0, %s25
      %s28 = sadd.s32 1, %s19
      %s29 = scalar_select %p26, %s28, %s19
      %p30 = scmp.ge.s32.totalorder %s29, 2
      %s31 = scalar_select %p30, 0, %s29
      %s32 = ssub.s32 %s19, %s31
      %p33 = scmp.eq.s32.totalorder %s32, 0
      %s35 = sadd.s32 %s34, 1
      %s36 = scalar_select %p33, %s34, %s35
      %p39 = pneg %p33
      %p40 = scmp.eq.s32.totalorder %s12, 1
      %p41 = por %p39, %p40
      %p42 = scmp.ne.s32.totalorder %s34, %s37
      %p43 = scmp.eq.s32.totalorder %s12, 0
      %p44 = por %p42, %p43
      %p45 = scmp.ne.s32.totalorder %s34, %s37
      %p46 = scmp.eq.s32.totalorder %s17, 1
      %p47 = por %p45, %p46
      %p48 = scmp.ne.s32.totalorder %s37, %s38
      %p49 = scmp.eq.s32.totalorder %s17, 0
      %p50 = por %p48, %p49
      %p51 = scmp.ne.s32.totalorder %s37, %s38
      %p52 = scmp.eq.s32.totalorder %s18, 1
      %p53 = por %p51, %p52
      %p55 = scmp.ne.s32.totalorder %s38, %s54
      %p56 = scmp.eq.s32.totalorder %s18, 0
      %p57 = por %p55, %p56
      %s59 = sadd.s32 %s58, 1
      %p62 = scmp.eq.s32.totalorder %s12, 1
      %p63 = scmp.ne.s32.totalorder %s58, %s60
      %p64 = scmp.eq.s32.totalorder %s12, 0
      %p65 = por %p63, %p64
      %p66 = scmp.ne.s32.totalorder %s58, %s60
      %p67 = scmp.eq.s32.totalorder %s17, 1
      %p68 = por %p66, %p67
      %p69 = scmp.ne.s32.totalorder %s60, %s61
      %p70 = scmp.eq.s32.totalorder %s17, 0
      %p71 = por %p69, %p70
      %p72 = scmp.ne.s32.totalorder %s60, %s61
      %p73 = scmp.eq.s32.totalorder %s18, 1
      %p74 = por %p72, %p73
      %p76 = scmp.ne.s32.totalorder %s61, %s75
      %p77 = scmp.eq.s32.totalorder %s18, 0
      %p78 = por %p76, %p77
      %s80 = sadd.s32 %s79, 1
      %p83 = scmp.eq.s32.totalorder %s12, 1
      %p84 = scmp.ne.s32.totalorder %s79, %s81
      %p85 = scmp.eq.s32.totalorder %s12, 0
      %p86 = por %p84, %p85
      %p87 = scmp.ne.s32.totalorder %s79, %s81
      %p88 = scmp.eq.s32.totalorder %s17, 1
      %p89 = por %p87, %p88
      %p90 = scmp.ne.s32.totalorder %s81, %s82
      %p91 = scmp.eq.s32.totalorder %s17, 0
      %p92 = por %p90, %p91
      %p93 = scmp.ne.s32.totalorder %s81, %s82
      %p94 = scmp.eq.s32.totalorder %s18, 1
      %p95 = por %p93, %p94
      %p97 = scmp.ne.s32.totalorder %s82, %s96
      %p98 = scmp.eq.s32.totalorder %s18, 0
      %p99 = por %p97, %p98
      %s100 = ssub.s32 %s19, %s31
      %s101 = ssub.s32 %s20, %s27
      %s102 = sor.u32 %s100, %s101
      %p103 = scmp.eq.s32.totalorder %s102, 0
      %s105 = sadd.s32 %s104, 1
      %s106 = scalar_select %p103, %s104, %s105
      %p109 = pneg %p103
      %p110 = scmp.eq.s32.totalorder %s12, 1
      %p111 = por %p109, %p110
      %p112 = scmp.ne.s32.totalorder %s104, %s107
      %p113 = scmp.eq.s32.totalorder %s12, 0
      %p114 = por %p112, %p113
      %p115 = scmp.ne.s32.totalorder %s104, %s107
      %p116 = scmp.eq.s32.totalorder %s17, 1
      %p117 = por %p115, %p116
      %p118 = scmp.ne.s32.totalorder %s107, %s108
      %p119 = scmp.eq.s32.totalorder %s17, 0
      %p120 = por %p118, %p119
      %p121 = scmp.ne.s32.totalorder %s107, %s108
      %p122 = scmp.eq.s32.totalorder %s18, 1
      %p123 = por %p121, %p122
      %p125 = scmp.ne.s32.totalorder %s108, %s124
      %p126 = scmp.eq.s32.totalorder %s18, 0
      %p127 = por %p125, %p126
      %p128 = scmp.le.s32.totalorder 1, %s12
      %p129 = scmp.lt.s32.totalorder %s12, 3
      %p130 = pnand %p128, %p129
      %p131 = pneg %p130
      // Predicated region
      $region9: #{tpu_custom_call.1} parent=5 // pred_check
        _
      $region10: #{tpu_custom_call.1} parent=5 // pred_check_branch
        %133 = sbr.rel (%p130) target = $region12
      $region11: #{tpu_custom_call.1} parent=5 // pred_region
        %s134 = ssub.s32 %s12, 1
        // Predicated region
        $region13: #{tpu_custom_call.1} parent=11 // pred_check
          %p135 = pneg %p71
        $region14: #{tpu_custom_call.1} parent=11 // pred_check_branch
          %137 = sbr.rel (%p135) target = $region16
        $region15: #{tpu_custom_call.1} parent=11 // pred_region
          _
        $region16: #{tpu_custom_call.1} parent=11 // pred_fallthru
          _
        // Predicated region
        $region17: #{tpu_custom_call.1} parent=11 // pred_check
          %p138 = pneg %p92
        $region18: #{tpu_custom_call.1} parent=11 // pred_check_branch
          %140 = sbr.rel (%p138) target = $region20
        $region19: #{tpu_custom_call.1} parent=11 // pred_region
          _
        $region20: #{tpu_custom_call.1} parent=11 // pred_fallthru
          _
      $region12: #{tpu_custom_call.1} parent=5 // pred_fallthru
        _
      %p141 = scmp.lt.s32.totalorder %s12, 2
      // Predicated region
      $region21: #{tpu_custom_call.1} parent=5 // pred_check
        %p142 = pneg %p141
      $region22: #{tpu_custom_call.1} parent=5 // pred_check_branch
        %144 = sbr.rel (%p142) target = $region24
      $region23: #{tpu_custom_call.1} parent=5 // pred_region
        // Predicated region
        $region25: #{tpu_custom_call.1} parent=23 // pred_check
          %p145 = pneg %p44
        $region26: #{tpu_custom_call.1} parent=23 // pred_check_branch
          %147 = sbr.rel (%p145) target = $region28
        $region27: #{tpu_custom_call.1} parent=23 // pred_region
          %p148 = scmp.lt.s32.totalorder %s19, 1
          %s149 = scalar_select %p148, %s19, 1
          %s150 = smul.addr %s149, 54
          %s151 = smul.addr %s150, 8
          %s152 = scalar_lea.vmem %s0, %s151
        $region28: #{tpu_custom_call.1} parent=23 // pred_fallthru
          _
      $region24: #{tpu_custom_call.1} parent=5 // pred_fallthru
        _
      %p153 = scmp.le.s32.totalorder 1, %s12
      %p154 = scmp.lt.s32.totalorder %s12, 3
      %p155 = pnand %p153, %p154
      %p156 = pneg %p155
      // Predicated region
      $region29: #{tpu_custom_call.1} parent=5 // pred_check
        _
      $region30: #{tpu_custom_call.1} parent=5 // pred_check_branch
        %158 = sbr.rel (%p155) target = $region32
      $region31: #{tpu_custom_call.1} parent=5 // pred_region
        %s159 = ssub.s32 %s12, 1
        %p160 = scmp.lt.s32.totalorder %s21, 1
        %s161 = scalar_select %p160, %s21, 1
        %s162 = smul.addr %s161, 54
        %s163 = smul.addr %s162, 8
        %s164 = scalar_lea.vmem %s0, %s163
        %p165 = pneg %p50
        %p166 = pneg %p47
        %p167 = pneg %p71
        %p168 = pneg %p68
        %p169 = pneg %p92
        %p170 = pneg %p89
        %p171 = pneg %p120
        %p172 = pneg %p117
        %s173 = sand.u32 %s107, 1
        %s174 = scalar_lea.sflag [#allocation3], %s173
        %s175 = sand.u32 %s107, 1
        %s176 = smul.addr %s175, 256
        %s177 = scalar_lea.vmem [#allocation2], %s176
        %p178 = scmp.lt.s32.totalorder %s21, 1
        %s179 = scalar_select %p178, %s21, 1
        %s180 = smul.addr %s179, 54
        %s181 = smul.addr %s180, 8
        %s182 = scalar_lea.vmem %s0, %s181
        %s183 = smul.u32 16, %s22
        %v184 = vld [vmem:[%s182] sm:$0xff]
        %v185 = vld [vmem:[%s182 + $0x8] sm:$0xff]
        %v186 = vld [vmem:[%s182 + $0x18] sm:$0xff]
        %v187 = vld [vmem:[%s182 + $0x20] sm:$0xff]
        %v188 = vld [vmem:[%s182 + $0x30] sm:$0xff]
        %v189 = vld [vmem:[%s182 + $0x38] sm:$0xff]
        %v190 = vld [vmem:[%s182 + $0x48] sm:$0xff]
        %v191 = vld [vmem:[%s182 + $0x50] sm:$0xff]
        %v192 = vld [vmem:[%s182 + $0x60] sm:$0xff]
        %v193 = vld [vmem:[%s182 + $0x68] sm:$0xff]
        %v194 = vld [vmem:[%s182 + $0x78] sm:$0xff]
        %v195 = vld [vmem:[%s182 + $0x80] sm:$0xff]
        %v196 = vld [vmem:[%s182 + $0x90] sm:$0xff]
        %v197 = vld [vmem:[%s182 + $0x98] sm:$0xff]
        %v198 = vld [vmem:[%s182 + $0xa8] sm:$0xff]
        %v199 = vld [vmem:[%s182 + $0xb0] sm:$0xff]
        %v200 = vld [vmem:[%s182 + $0xc0] sm:$0xff]
        %v201 = vld [vmem:[%s182 + $0xc8] sm:$0xff]
        %v202 = vld [vmem:[%s182 + $0xd8] sm:$0xff]
        %v203 = vld [vmem:[%s182 + $0xe0] sm:$0xff]
        %v204 = vld [vmem:[%s182 + $0xf0] sm:$0xff]
        %v205 = vld [vmem:[%s182 + $0xf8] sm:$0xff]
        %v206 = vld [vmem:[%s182 + $0x108] sm:$0xff]
        %v207 = vld [vmem:[%s182 + $0x110] sm:$0xff]
        %v208 = vld [vmem:[%s182 + $0x120] sm:$0xff]
        %v209 = vld [vmem:[%s182 + $0x128] sm:$0xff]
        %v210 = vld [vmem:[%s182 + $0x138] sm:$0xff]
        %v211 = vld [vmem:[%s182 + $0x140] sm:$0xff]
        %v212 = vld [vmem:[%s182 + $0x150] sm:$0xff]
        %v213 = vld [vmem:[%s182 + $0x158] sm:$0xff]
        %v214 = vld [vmem:[%s182 + $0x168] sm:$0xff]
        %v215 = vld [vmem:[%s182 + $0x170] sm:$0xff]
        %v216 = vld [vmem:[%s182 + $0x1] sm:$0xff]
        %v217 = vld [vmem:[%s182 + $0x9] sm:$0xff]
        %v218 = vld [vmem:[%s182 + $0x19] sm:$0xff]
        %v219 = vld [vmem:[%s182 + $0x21] sm:$0xff]
        %v220 = vld [vmem:[%s182 + $0x31] sm:$0xff]
        %v221 = vld [vmem:[%s182 + $0x39] sm:$0xff]
        %v222 = vld [vmem:[%s182 + $0x49] sm:$0xff]
        %v223 = vld [vmem:[%s182 + $0x51] sm:$0xff]
        %v224 = vld [vmem:[%s182 + $0x61] sm:$0xff]
        %v225 = vld [vmem:[%s182 + $0x69] sm:$0xff]
        %v226 = vld [vmem:[%s182 + $0x79] sm:$0xff]
        %v227 = vld [vmem:[%s182 + $0x81] sm:$0xff]
        %v228 = vld [vmem:[%s182 + $0x91] sm:$0xff]
        %v229 = vld [vmem:[%s182 + $0x99] sm:$0xff]
        %v230 = vld [vmem:[%s182 + $0xa9] sm:$0xff]
        %v231 = vld [vmem:[%s182 + $0xb1] sm:$0xff]
        %v232 = vld [vmem:[%s182 + $0xc1] sm:$0xff]
        %v233 = vld [vmem:[%s182 + $0xc9] sm:$0xff]
        %v234 = vld [vmem:[%s182 + $0xd9] sm:$0xff]
        %v235 = vld [vmem:[%s182 + $0xe1] sm:$0xff]
        %v236 = vld [vmem:[%s182 + $0xf1] sm:$0xff]
        %v237 = vld [vmem:[%s182 + $0xf9] sm:$0xff]
        %v238 = vld [vmem:[%s182 + $0x109] sm:$0xff]
        %v239 = vld [vmem:[%s182 + $0x111] sm:$0xff]
        %v240 = vld [vmem:[%s182 + $0x121] sm:$0xff]
        %v241 = vld [vmem:[%s182 + $0x129] sm:$0xff]
        %v242 = vld [vmem:[%s182 + $0x139] sm:$0xff]
        %v243 = vld [vmem:[%s182 + $0x141] sm:$0xff]
        %v244 = vld [vmem:[%s182 + $0x151] sm:$0xff]
        %v245 = vld [vmem:[%s182 + $0x159] sm:$0xff]
        %v246 = vld [vmem:[%s182 + $0x169] sm:$0xff]
        %v247 = vld [vmem:[%s182 + $0x171] sm:$0xff]
        %v248 = vld [vmem:[%s182 + $0x2] sm:$0xff]
        %v249 = vld [vmem:[%s182 + $0xa] sm:$0xff]
        %v250 = vld [vmem:[%s182 + $0x1a] sm:$0xff]
        %v251 = vld [vmem:[%s182 + $0x22] sm:$0xff]
        %v252 = vld [vmem:[%s182 + $0x32] sm:$0xff]
        %v253 = vld [vmem:[%s182 + $0x3a] sm:$0xff]
        %v254 = vld [vmem:[%s182 + $0x4a] sm:$0xff]
        %v255 = vld [vmem:[%s182 + $0x52] sm:$0xff]
        %v256 = vld [vmem:[%s182 + $0x62] sm:$0xff]
        %v257 = vld [vmem:[%s182 + $0x6a] sm:$0xff]
        %v258 = vld [vmem:[%s182 + $0x7a] sm:$0xff]
        %v259 = vld [vmem:[%s182 + $0x82] sm:$0xff]
        %v260 = vld [vmem:[%s182 + $0x92] sm:$0xff]
        %v261 = vld [vmem:[%s182 + $0x9a] sm:$0xff]
        %v262 = vld [vmem:[%s182 + $0xaa] sm:$0xff]
        %v263 = vld [vmem:[%s182 + $0xb2] sm:$0xff]
        %v264 = vld [vmem:[%s182 + $0xc2] sm:$0xff]
        %v265 = vld [vmem:[%s182 + $0xca] sm:$0xff]
        %v266 = vld [vmem:[%s182 + $0xda] sm:$0xff]
        %v267 = vld [vmem:[%s182 + $0xe2] sm:$0xff]
        %v268 = vld [vmem:[%s182 + $0xf2] sm:$0xff]
        %v269 = vld [vmem:[%s182 + $0xfa] sm:$0xff]
        %v270 = vld [vmem:[%s182 + $0x10a] sm:$0xff]
        %v271 = vld [vmem:[%s182 + $0x112] sm:$0xff]
        %v272 = vld [vmem:[%s182 + $0x122] sm:$0xff]
        %v273 = vld [vmem:[%s182 + $0x12a] sm:$0xff]
        %v274 = vld [vmem:[%s182 + $0x13a] sm:$0xff]
        %v275 = vld [vmem:[%s182 + $0x142] sm:$0xff]
        %v276 = vld [vmem:[%s182 + $0x152] sm:$0xff]
        %v277 = vld [vmem:[%s182 + $0x15a] sm:$0xff]
        %v278 = vld [vmem:[%s182 + $0x16a] sm:$0xff]
        %v279 = vld [vmem:[%s182 + $0x172] sm:$0xff]
        %s280 = scalar_lea.vmem %s182, 24
        %v281 = vld [vmem:[%s280] sm:$0xff]
        %v282 = vld [vmem:[%s280 + $0x8] sm:$0xff]
        %v283 = vld [vmem:[%s280 + $0x18] sm:$0xff]
        %v284 = vld [vmem:[%s280 + $0x20] sm:$0xff]
        %v285 = vld [vmem:[%s280 + $0x30] sm:$0xff]
        %v286 = vld [vmem:[%s280 + $0x38] sm:$0xff]
        %v287 = vld [vmem:[%s280 + $0x48] sm:$0xff]
        %v288 = vld [vmem:[%s280 + $0x50] sm:$0xff]
        %v289 = vld [vmem:[%s280 + $0x60] sm:$0xff]
        %v290 = vld [vmem:[%s280 + $0x68] sm:$0xff]
        %v291 = vld [vmem:[%s280 + $0x78] sm:$0xff]
        %v292 = vld [vmem:[%s280 + $0x80] sm:$0xff]
        %v293 = vld [vmem:[%s280 + $0x90] sm:$0xff]
        %v294 = vld [vmem:[%s280 + $0x98] sm:$0xff]
        %v295 = vld [vmem:[%s280 + $0xa8] sm:$0xff]
        %v296 = vld [vmem:[%s280 + $0xb0] sm:$0xff]
        %v297 = vld [vmem:[%s280 + $0xc0] sm:$0xff]
        %v298 = vld [vmem:[%s280 + $0xc8] sm:$0xff]
        %v299 = vld [vmem:[%s280 + $0xd8] sm:$0xff]
        %v300 = vld [vmem:[%s280 + $0xe0] sm:$0xff]
        %v301 = vld [vmem:[%s280 + $0xf0] sm:$0xff]
        %v302 = vld [vmem:[%s280 + $0xf8] sm:$0xff]
        %v303 = vld [vmem:[%s280 + $0x108] sm:$0xff]
        %v304 = vld [vmem:[%s280 + $0x110] sm:$0xff]
        %v305 = vld [vmem:[%s280 + $0x120] sm:$0xff]
        %v306 = vld [vmem:[%s280 + $0x128] sm:$0xff]
        %v307 = vld [vmem:[%s280 + $0x138] sm:$0xff]
        %v308 = vld [vmem:[%s280 + $0x140] sm:$0xff]
        %v309 = vld [vmem:[%s280 + $0x150] sm:$0xff]
        %v310 = vld [vmem:[%s280 + $0x158] sm:$0xff]
        %v311 = vld [vmem:[%s280 + $0x168] sm:$0xff]
        %v312 = vld [vmem:[%s280 + $0x170] sm:$0xff]
        %v313 = vld [vmem:[%s280 + $0x1] sm:$0xff]
        %v314 = vld [vmem:[%s280 + $0x9] sm:$0xff]
        %v315 = vld [vmem:[%s280 + $0x19] sm:$0xff]
        %v316 = vld [vmem:[%s280 + $0x21] sm:$0xff]
        %v317 = vld [vmem:[%s280 + $0x31] sm:$0xff]
        %v318 = vld [vmem:[%s280 + $0x39] sm:$0xff]
        %v319 = vld [vmem:[%s280 + $0x49] sm:$0xff]
        %v320 = vld [vmem:[%s280 + $0x51] sm:$0xff]
        %v321 = vld [vmem:[%s280 + $0x61] sm:$0xff]
        %v322 = vld [vmem:[%s280 + $0x69] sm:$0xff]
        %v323 = vld [vmem:[%s280 + $0x79] sm:$0xff]
        %v324 = vld [vmem:[%s280 + $0x81] sm:$0xff]
        %v325 = vld [vmem:[%s280 + $0x91] sm:$0xff]
        %v326 = vld [vmem:[%s280 + $0x99] sm:$0xff]
        %v327 = vld [vmem:[%s280 + $0xa9] sm:$0xff]
        %v328 = vld [vmem:[%s280 + $0xb1] sm:$0xff]
        %v329 = vld [vmem:[%s280 + $0xc1] sm:$0xff]
        %v330 = vld [vmem:[%s280 + $0xc9] sm:$0xff]
        %v331 = vld [vmem:[%s280 + $0xd9] sm:$0xff]
        %v332 = vld [vmem:[%s280 + $0xe1] sm:$0xff]
        %v333 = vld [vmem:[%s280 + $0xf1] sm:$0xff]
        %v334 = vld [vmem:[%s280 + $0xf9] sm:$0xff]
        %v335 = vld [vmem:[%s280 + $0x109] sm:$0xff]
        %v336 = vld [vmem:[%s280 + $0x111] sm:$0xff]
        %v337 = vld [vmem:[%s280 + $0x121] sm:$0xff]
        %v338 = vld [vmem:[%s280 + $0x129] sm:$0xff]
        %v339 = vld [vmem:[%s280 + $0x139] sm:$0xff]
        %v340 = vld [vmem:[%s280 + $0x141] sm:$0xff]
        %v341 = vld [vmem:[%s280 + $0x151] sm:$0xff]
        %v342 = vld [vmem:[%s280 + $0x159] sm:$0xff]
        %v343 = vld [vmem:[%s280 + $0x169] sm:$0xff]
        %v344 = vld [vmem:[%s280 + $0x171] sm:$0xff]
        %v345 = vld [vmem:[%s280 + $0x2] sm:$0xff]
        %v346 = vld [vmem:[%s280 + $0xa] sm:$0xff]
        %v347 = vld [vmem:[%s280 + $0x1a] sm:$0xff]
        %v348 = vld [vmem:[%s280 + $0x22] sm:$0xff]
        %v349 = vld [vmem:[%s280 + $0x32] sm:$0xff]
        %v350 = vld [vmem:[%s280 + $0x3a] sm:$0xff]
        %v351 = vld [vmem:[%s280 + $0x4a] sm:$0xff]
        %v352 = vld [vmem:[%s280 + $0x52] sm:$0xff]
        %v353 = vld [vmem:[%s280 + $0x62] sm:$0xff]
        %v354 = vld [vmem:[%s280 + $0x6a] sm:$0xff]
        %v355 = vld [vmem:[%s280 + $0x7a] sm:$0xff]
        %v356 = vld [vmem:[%s280 + $0x82] sm:$0xff]
        %v357 = vld [vmem:[%s280 + $0x92] sm:$0xff]
        %v358 = vld [vmem:[%s280 + $0x9a] sm:$0xff]
        %v359 = vld [vmem:[%s280 + $0xaa] sm:$0xff]
        %v360 = vld [vmem:[%s280 + $0xb2] sm:$0xff]
        %v361 = vld [vmem:[%s280 + $0xc2] sm:$0xff]
        %v362 = vld [vmem:[%s280 + $0xca] sm:$0xff]
        %v363 = vld [vmem:[%s280 + $0xda] sm:$0xff]
        %v364 = vld [vmem:[%s280 + $0xe2] sm:$0xff]
        %v365 = vld [vmem:[%s280 + $0xf2] sm:$0xff]
        %v366 = vld [vmem:[%s280 + $0xfa] sm:$0xff]
        %v367 = vld [vmem:[%s280 + $0x10a] sm:$0xff]
        %v368 = vld [vmem:[%s280 + $0x112] sm:$0xff]
        %v369 = vld [vmem:[%s280 + $0x122] sm:$0xff]
        %v370 = vld [vmem:[%s280 + $0x12a] sm:$0xff]
        %v371 = vld [vmem:[%s280 + $0x13a] sm:$0xff]
        %v372 = vld [vmem:[%s280 + $0x142] sm:$0xff]
        %v373 = vld [vmem:[%s280 + $0x152] sm:$0xff]
        %v374 = vld [vmem:[%s280 + $0x15a] sm:$0xff]
        %v375 = vld [vmem:[%s280 + $0x16a] sm:$0xff]
        %v376 = vld [vmem:[%s280 + $0x172] sm:$0xff]
        %s377 = scalar_lea.vmem %s182, 48
        %v378 = vld [vmem:[%s377] sm:$0xff]
        %v379 = vld [vmem:[%s377 + $0x8] sm:$0xff]
        %v380 = vld [vmem:[%s377 + $0x18] sm:$0xff]
        %v381 = vld [vmem:[%s377 + $0x20] sm:$0xff]
        %v382 = vld [vmem:[%s377 + $0x30] sm:$0xff]
        %v383 = vld [vmem:[%s377 + $0x38] sm:$0xff]
        %v384 = vld [vmem:[%s377 + $0x48] sm:$0xff]
        %v385 = vld [vmem:[%s377 + $0x50] sm:$0xff]
        %v386 = vld [vmem:[%s377 + $0x60] sm:$0xff]
        %v387 = vld [vmem:[%s377 + $0x68] sm:$0xff]
        %v388 = vld [vmem:[%s377 + $0x78] sm:$0xff]
        %v389 = vld [vmem:[%s377 + $0x80] sm:$0xff]
        %v390 = vld [vmem:[%s377 + $0x90] sm:$0xff]
        %v391 = vld [vmem:[%s377 + $0x98] sm:$0xff]
        %v392 = vld [vmem:[%s377 + $0xa8] sm:$0xff]
        %v393 = vld [vmem:[%s377 + $0xb0] sm:$0xff]
        %v394 = vld [vmem:[%s377 + $0xc0] sm:$0xff]
        %v395 = vld [vmem:[%s377 + $0xc8] sm:$0xff]
        %v396 = vld [vmem:[%s377 + $0xd8] sm:$0xff]
        %v397 = vld [vmem:[%s377 + $0xe0] sm:$0xff]
        %v398 = vld [vmem:[%s377 + $0xf0] sm:$0xff]
        %v399 = vld [vmem:[%s377 + $0xf8] sm:$0xff]
        %v400 = vld [vmem:[%s377 + $0x108] sm:$0xff]
        %v401 = vld [vmem:[%s377 + $0x110] sm:$0xff]
        %v402 = vld [vmem:[%s377 + $0x120] sm:$0xff]
        %v403 = vld [vmem:[%s377 + $0x128] sm:$0xff]
        %v404 = vld [vmem:[%s377 + $0x138] sm:$0xff]
        %v405 = vld [vmem:[%s377 + $0x140] sm:$0xff]
        %v406 = vld [vmem:[%s377 + $0x150] sm:$0xff]
        %v407 = vld [vmem:[%s377 + $0x158] sm:$0xff]
        %v408 = vld [vmem:[%s377 + $0x168] sm:$0xff]
        %v409 = vld [vmem:[%s377 + $0x170] sm:$0xff]
        %v410 = vld [vmem:[%s377 + $0x1] sm:$0xff]
        %v411 = vld [vmem:[%s377 + $0x9] sm:$0xff]
        %v412 = vld [vmem:[%s377 + $0x19] sm:$0xff]
        %v413 = vld [vmem:[%s377 + $0x21] sm:$0xff]
        %v414 = vld [vmem:[%s377 + $0x31] sm:$0xff]
        %v415 = vld [vmem:[%s377 + $0x39] sm:$0xff]
        %v416 = vld [vmem:[%s377 + $0x49] sm:$0xff]
        %v417 = vld [vmem:[%s377 + $0x51] sm:$0xff]
        %v418 = vld [vmem:[%s377 + $0x61] sm:$0xff]
        %v419 = vld [vmem:[%s377 + $0x69] sm:$0xff]
        %v420 = vld [vmem:[%s377 + $0x79] sm:$0xff]
        %v421 = vld [vmem:[%s377 + $0x81] sm:$0xff]
        %v422 = vld [vmem:[%s377 + $0x91] sm:$0xff]
        %v423 = vld [vmem:[%s377 + $0x99] sm:$0xff]
        %v424 = vld [vmem:[%s377 + $0xa9] sm:$0xff]
        %v425 = vld [vmem:[%s377 + $0xb1] sm:$0xff]
        %v426 = vld [vmem:[%s377 + $0xc1] sm:$0xff]
        %v427 = vld [vmem:[%s377 + $0xc9] sm:$0xff]
        %v428 = vld [vmem:[%s377 + $0xd9] sm:$0xff]
        %v429 = vld [vmem:[%s377 + $0xe1] sm:$0xff]
        %v430 = vld [vmem:[%s377 + $0xf1] sm:$0xff]
        %v431 = vld [vmem:[%s377 + $0xf9] sm:$0xff]
        %v432 = vld [vmem:[%s377 + $0x109] sm:$0xff]
        %v433 = vld [vmem:[%s377 + $0x111] sm:$0xff]
        %v434 = vld [vmem:[%s377 + $0x121] sm:$0xff]
        %v435 = vld [vmem:[%s377 + $0x129] sm:$0xff]
        %v436 = vld [vmem:[%s377 + $0x139] sm:$0xff]
        %v437 = vld [vmem:[%s377 + $0x141] sm:$0xff]
        %v438 = vld [vmem:[%s377 + $0x151] sm:$0xff]
        %v439 = vld [vmem:[%s377 + $0x159] sm:$0xff]
        %v440 = vld [vmem:[%s377 + $0x169] sm:$0xff]
        %v441 = vld [vmem:[%s377 + $0x171] sm:$0xff]
        %v442 = vld [vmem:[%s377 + $0x2] sm:$0xff]
        %v443 = vld [vmem:[%s377 + $0xa] sm:$0xff]
        %v444 = vld [vmem:[%s377 + $0x1a] sm:$0xff]
        %v445 = vld [vmem:[%s377 + $0x22] sm:$0xff]
        %v446 = vld [vmem:[%s377 + $0x32] sm:$0xff]
        %v447 = vld [vmem:[%s377 + $0x3a] sm:$0xff]
        %v448 = vld [vmem:[%s377 + $0x4a] sm:$0xff]
        %v449 = vld [vmem:[%s377 + $0x52] sm:$0xff]
        %v450 = vld [vmem:[%s377 + $0x62] sm:$0xff]
        %v451 = vld [vmem:[%s377 + $0x6a] sm:$0xff]
        %v452 = vld [vmem:[%s377 + $0x7a] sm:$0xff]
        %v453 = vld [vmem:[%s377 + $0x82] sm:$0xff]
        %v454 = vld [vmem:[%s377 + $0x92] sm:$0xff]
        %v455 = vld [vmem:[%s377 + $0x9a] sm:$0xff]
        %v456 = vld [vmem:[%s377 + $0xaa] sm:$0xff]
        %v457 = vld [vmem:[%s377 + $0xb2] sm:$0xff]
        %v458 = vld [vmem:[%s377 + $0xc2] sm:$0xff]
        %v459 = vld [vmem:[%s377 + $0xca] sm:$0xff]
        %v460 = vld [vmem:[%s377 + $0xda] sm:$0xff]
        %v461 = vld [vmem:[%s377 + $0xe2] sm:$0xff]
        %v462 = vld [vmem:[%s377 + $0xf2] sm:$0xff]
        %v463 = vld [vmem:[%s377 + $0xfa] sm:$0xff]
        %v464 = vld [vmem:[%s377 + $0x10a] sm:$0xff]
        %v465 = vld [vmem:[%s377 + $0x112] sm:$0xff]
        %v466 = vld [vmem:[%s377 + $0x122] sm:$0xff]
        %v467 = vld [vmem:[%s377 + $0x12a] sm:$0xff]
        %v468 = vld [vmem:[%s377 + $0x13a] sm:$0xff]
        %v469 = vld [vmem:[%s377 + $0x142] sm:$0xff]
        %v470 = vld [vmem:[%s377 + $0x152] sm:$0xff]
        %v471 = vld [vmem:[%s377 + $0x15a] sm:$0xff]
        %v472 = vld [vmem:[%s377 + $0x16a] sm:$0xff]
        %v473 = vld [vmem:[%s377 + $0x172] sm:$0xff]
        %506 = vrot.lane.b32.xlu0 %v216, 4
        %v507 = vpop.permute.xlu0 %506
        %508 = vrot.lane.b32.xlu0 %v217, 4
        %v509 = vpop.permute.xlu0 %508
        %510 = vrot.lane.b32.xlu0 %v218, 4
        %v511 = vpop.permute.xlu0 %510
        %512 = vrot.lane.b32.xlu0 %v219, 4
        %v513 = vpop.permute.xlu0 %512
        %514 = vrot.lane.b32.xlu0 %v220, 4
        %v515 = vpop.permute.xlu0 %514
        %516 = vrot.lane.b32.xlu0 %v221, 4
        %v517 = vpop.permute.xlu0 %516
        %518 = vrot.lane.b32.xlu0 %v222, 4
        %v519 = vpop.permute.xlu0 %518
        %520 = vrot.lane.b32.xlu0 %v223, 4
        %v521 = vpop.permute.xlu0 %520
        %522 = vrot.lane.b32.xlu0 %v224, 4
        %v523 = vpop.permute.xlu0 %522
        %524 = vrot.lane.b32.xlu0 %v225, 4
        %v525 = vpop.permute.xlu0 %524
        %526 = vrot.lane.b32.xlu0 %v226, 4
        %v527 = vpop.permute.xlu0 %526
        %528 = vrot.lane.b32.xlu0 %v227, 4
        %v529 = vpop.permute.xlu0 %528
        %530 = vrot.lane.b32.xlu0 %v228, 4
        %v531 = vpop.permute.xlu0 %530
        %532 = vrot.lane.b32.xlu0 %v229, 4
        %v533 = vpop.permute.xlu0 %532
        %534 = vrot.lane.b32.xlu0 %v230, 4
        %v535 = vpop.permute.xlu0 %534
        %536 = vrot.lane.b32.xlu0 %v231, 4
        %v537 = vpop.permute.xlu0 %536
        %538 = vrot.lane.b32.xlu0 %v232, 4
        %v539 = vpop.permute.xlu0 %538
        %540 = vrot.lane.b32.xlu0 %v233, 4
        %v541 = vpop.permute.xlu0 %540
        %542 = vrot.lane.b32.xlu0 %v234, 4
        %v543 = vpop.permute.xlu0 %542
        %544 = vrot.lane.b32.xlu0 %v235, 4
        %v545 = vpop.permute.xlu0 %544
        %546 = vrot.lane.b32.xlu0 %v236, 4
        %v547 = vpop.permute.xlu0 %546
        %548 = vrot.lane.b32.xlu0 %v237, 4
        %v549 = vpop.permute.xlu0 %548
        %550 = vrot.lane.b32.xlu0 %v238, 4
        %v551 = vpop.permute.xlu0 %550
        %552 = vrot.lane.b32.xlu0 %v239, 4
        %v553 = vpop.permute.xlu0 %552
        %554 = vrot.lane.b32.xlu0 %v240, 4
        %v555 = vpop.permute.xlu0 %554
        %556 = vrot.lane.b32.xlu0 %v241, 4
        %v557 = vpop.permute.xlu0 %556
        %558 = vrot.lane.b32.xlu0 %v242, 4
        %v559 = vpop.permute.xlu0 %558
        %560 = vrot.lane.b32.xlu0 %v243, 4
        %v561 = vpop.permute.xlu0 %560
        %562 = vrot.lane.b32.xlu0 %v244, 4
        %v563 = vpop.permute.xlu0 %562
        %564 = vrot.lane.b32.xlu0 %v245, 4
        %v565 = vpop.permute.xlu0 %564
        %566 = vrot.lane.b32.xlu0 %v246, 4
        %v567 = vpop.permute.xlu0 %566
        %568 = vrot.lane.b32.xlu0 %v247, 4
        %v569 = vpop.permute.xlu0 %568
        %634 = vrot.lane.b32.xlu0 %v248, 8
        %v635 = vpop.permute.xlu0 %634
        %636 = vrot.lane.b32.xlu0 %v249, 8
        %v637 = vpop.permute.xlu0 %636
        %638 = vrot.lane.b32.xlu0 %v250, 8
        %v639 = vpop.permute.xlu0 %638
        %640 = vrot.lane.b32.xlu0 %v251, 8
        %v641 = vpop.permute.xlu0 %640
        %642 = vrot.lane.b32.xlu0 %v252, 8
        %v643 = vpop.permute.xlu0 %642
        %644 = vrot.lane.b32.xlu0 %v253, 8
        %v645 = vpop.permute.xlu0 %644
        %646 = vrot.lane.b32.xlu0 %v254, 8
        %v647 = vpop.permute.xlu0 %646
        %648 = vrot.lane.b32.xlu0 %v255, 8
        %v649 = vpop.permute.xlu0 %648
        %650 = vrot.lane.b32.xlu0 %v256, 8
        %v651 = vpop.permute.xlu0 %650
        %652 = vrot.lane.b32.xlu0 %v257, 8
        %v653 = vpop.permute.xlu0 %652
        %654 = vrot.lane.b32.xlu0 %v258, 8
        %v655 = vpop.permute.xlu0 %654
        %656 = vrot.lane.b32.xlu0 %v259, 8
        %v657 = vpop.permute.xlu0 %656
        %658 = vrot.lane.b32.xlu0 %v260, 8
        %v659 = vpop.permute.xlu0 %658
        %660 = vrot.lane.b32.xlu0 %v261, 8
        %v661 = vpop.permute.xlu0 %660
        %662 = vrot.lane.b32.xlu0 %v262, 8
        %v663 = vpop.permute.xlu0 %662
        %664 = vrot.lane.b32.xlu0 %v263, 8
        %v665 = vpop.permute.xlu0 %664
        %666 = vrot.lane.b32.xlu0 %v264, 8
        %v667 = vpop.permute.xlu0 %666
        %668 = vrot.lane.b32.xlu0 %v265, 8
        %v669 = vpop.permute.xlu0 %668
        %670 = vrot.lane.b32.xlu0 %v266, 8
        %v671 = vpop.permute.xlu0 %670
        %672 = vrot.lane.b32.xlu0 %v267, 8
        %v673 = vpop.permute.xlu0 %672
        %674 = vrot.lane.b32.xlu0 %v268, 8
        %v675 = vpop.permute.xlu0 %674
        %676 = vrot.lane.b32.xlu0 %v269, 8
        %v677 = vpop.permute.xlu0 %676
        %678 = vrot.lane.b32.xlu0 %v270, 8
        %v679 = vpop.permute.xlu0 %678
        %680 = vrot.lane.b32.xlu0 %v271, 8
        %v681 = vpop.permute.xlu0 %680
        %682 = vrot.lane.b32.xlu0 %v272, 8
        %v683 = vpop.permute.xlu0 %682
        %684 = vrot.lane.b32.xlu0 %v273, 8
        %v685 = vpop.permute.xlu0 %684
        %686 = vrot.lane.b32.xlu0 %v274, 8
        %v687 = vpop.permute.xlu0 %686
        %688 = vrot.lane.b32.xlu0 %v275, 8
        %v689 = vpop.permute.xlu0 %688
        %690 = vrot.lane.b32.xlu0 %v276, 8
        %v691 = vpop.permute.xlu0 %690
        %692 = vrot.lane.b32.xlu0 %v277, 8
        %v693 = vpop.permute.xlu0 %692
        %694 = vrot.lane.b32.xlu0 %v278, 8
        %v695 = vpop.permute.xlu0 %694
        %696 = vrot.lane.b32.xlu0 %v279, 8
        %v697 = vpop.permute.xlu0 %696
        %762 = vrot.lane.b32.xlu0 %v281, 12
        %v763 = vpop.permute.xlu0 %762
        %764 = vrot.lane.b32.xlu0 %v282, 12
        %v765 = vpop.permute.xlu0 %764
        %766 = vrot.lane.b32.xlu0 %v283, 12
        %v767 = vpop.permute.xlu0 %766
        %768 = vrot.lane.b32.xlu0 %v284, 12
        %v769 = vpop.permute.xlu0 %768
        %770 = vrot.lane.b32.xlu0 %v285, 12
        %v771 = vpop.permute.xlu0 %770
        %772 = vrot.lane.b32.xlu0 %v286, 12
        %v773 = vpop.permute.xlu0 %772
        %774 = vrot.lane.b32.xlu0 %v287, 12
        %v775 = vpop.permute.xlu0 %774
        %776 = vrot.lane.b32.xlu0 %v288, 12
        %v777 = vpop.permute.xlu0 %776
        %778 = vrot.lane.b32.xlu0 %v289, 12
        %v779 = vpop.permute.xlu0 %778
        %780 = vrot.lane.b32.xlu0 %v290, 12
        %v781 = vpop.permute.xlu0 %780
        %782 = vrot.lane.b32.xlu0 %v291, 12
        %v783 = vpop.permute.xlu0 %782
        %784 = vrot.lane.b32.xlu0 %v292, 12
        %v785 = vpop.permute.xlu0 %784
        %786 = vrot.lane.b32.xlu0 %v293, 12
        %v787 = vpop.permute.xlu0 %786
        %788 = vrot.lane.b32.xlu0 %v294, 12
        %v789 = vpop.permute.xlu0 %788
        %790 = vrot.lane.b32.xlu0 %v295, 12
        %v791 = vpop.permute.xlu0 %790
        %792 = vrot.lane.b32.xlu0 %v296, 12
        %v793 = vpop.permute.xlu0 %792
        %794 = vrot.lane.b32.xlu0 %v297, 12
        %v795 = vpop.permute.xlu0 %794
        %796 = vrot.lane.b32.xlu0 %v298, 12
        %v797 = vpop.permute.xlu0 %796
        %798 = vrot.lane.b32.xlu0 %v299, 12
        %v799 = vpop.permute.xlu0 %798
        %800 = vrot.lane.b32.xlu0 %v300, 12
        %v801 = vpop.permute.xlu0 %800
        %802 = vrot.lane.b32.xlu0 %v301, 12
        %v803 = vpop.permute.xlu0 %802
        %804 = vrot.lane.b32.xlu0 %v302, 12
        %v805 = vpop.permute.xlu0 %804
        %806 = vrot.lane.b32.xlu0 %v303, 12
        %v807 = vpop.permute.xlu0 %806
        %808 = vrot.lane.b32.xlu0 %v304, 12
        %v809 = vpop.permute.xlu0 %808
        %810 = vrot.lane.b32.xlu0 %v305, 12
        %v811 = vpop.permute.xlu0 %810
        %812 = vrot.lane.b32.xlu0 %v306, 12
        %v813 = vpop.permute.xlu0 %812
        %814 = vrot.lane.b32.xlu0 %v307, 12
        %v815 = vpop.permute.xlu0 %814
        %816 = vrot.lane.b32.xlu0 %v308, 12
        %v817 = vpop.permute.xlu0 %816
        %818 = vrot.lane.b32.xlu0 %v309, 12
        %v819 = vpop.permute.xlu0 %818
        %820 = vrot.lane.b32.xlu0 %v310, 12
        %v821 = vpop.permute.xlu0 %820
        %822 = vrot.lane.b32.xlu0 %v311, 12
        %v823 = vpop.permute.xlu0 %822
        %824 = vrot.lane.b32.xlu0 %v312, 12
        %v825 = vpop.permute.xlu0 %824
        %890 = vrot.lane.b32.xlu0 %v313, 16
        %v891 = vpop.permute.xlu0 %890
        %892 = vrot.lane.b32.xlu0 %v314, 16
        %v893 = vpop.permute.xlu0 %892
        %894 = vrot.lane.b32.xlu0 %v315, 16
        %v895 = vpop.permute.xlu0 %894
        %896 = vrot.lane.b32.xlu0 %v316, 16
        %v897 = vpop.permute.xlu0 %896
        %898 = vrot.lane.b32.xlu0 %v317, 16
        %v899 = vpop.permute.xlu0 %898
        %900 = vrot.lane.b32.xlu0 %v318, 16
        %v901 = vpop.permute.xlu0 %900
        %902 = vrot.lane.b32.xlu0 %v319, 16
        %v903 = vpop.permute.xlu0 %902
        %904 = vrot.lane.b32.xlu0 %v320, 16
        %v905 = vpop.permute.xlu0 %904
        %906 = vrot.lane.b32.xlu0 %v321, 16
        %v907 = vpop.permute.xlu0 %906
        %908 = vrot.lane.b32.xlu0 %v322, 16
        %v909 = vpop.permute.xlu0 %908
        %910 = vrot.lane.b32.xlu0 %v323, 16
        %v911 = vpop.permute.xlu0 %910
        %912 = vrot.lane.b32.xlu0 %v324, 16
        %v913 = vpop.permute.xlu0 %912
        %914 = vrot.lane.b32.xlu0 %v325, 16
        %v915 = vpop.permute.xlu0 %914
        %916 = vrot.lane.b32.xlu0 %v326, 16
        %v917 = vpop.permute.xlu0 %916
        %918 = vrot.lane.b32.xlu0 %v327, 16
        %v919 = vpop.permute.xlu0 %918
        %920 = vrot.lane.b32.xlu0 %v328, 16
        %v921 = vpop.permute.xlu0 %920
        %922 = vrot.lane.b32.xlu0 %v329, 16
        %v923 = vpop.permute.xlu0 %922
        %924 = vrot.lane.b32.xlu0 %v330, 16
        %v925 = vpop.permute.xlu0 %924
        %926 = vrot.lane.b32.xlu0 %v331, 16
        %v927 = vpop.permute.xlu0 %926
        %928 = vrot.lane.b32.xlu0 %v332, 16
        %v929 = vpop.permute.xlu0 %928
        %930 = vrot.lane.b32.xlu0 %v333, 16
        %v931 = vpop.permute.xlu0 %930
        %932 = vrot.lane.b32.xlu0 %v334, 16
        %v933 = vpop.permute.xlu0 %932
        %934 = vrot.lane.b32.xlu0 %v335, 16
        %v935 = vpop.permute.xlu0 %934
        %936 = vrot.lane.b32.xlu0 %v336, 16
        %v937 = vpop.permute.xlu0 %936
        %938 = vrot.lane.b32.xlu0 %v337, 16
        %v939 = vpop.permute.xlu0 %938
        %940 = vrot.lane.b32.xlu0 %v338, 16
        %v941 = vpop.permute.xlu0 %940
        %942 = vrot.lane.b32.xlu0 %v339, 16
        %v943 = vpop.permute.xlu0 %942
        %944 = vrot.lane.b32.xlu0 %v340, 16
        %v945 = vpop.permute.xlu0 %944
        %946 = vrot.lane.b32.xlu0 %v341, 16
        %v947 = vpop.permute.xlu0 %946
        %948 = vrot.lane.b32.xlu0 %v342, 16
        %v949 = vpop.permute.xlu0 %948
        %950 = vrot.lane.b32.xlu0 %v343, 16
        %v951 = vpop.permute.xlu0 %950
        %952 = vrot.lane.b32.xlu0 %v344, 16
        %v953 = vpop.permute.xlu0 %952
        %1018 = vrot.lane.b32.xlu0 %v345, 20
        %v1019 = vpop.permute.xlu0 %1018
        %1020 = vrot.lane.b32.xlu0 %v346, 20
        %v1021 = vpop.permute.xlu0 %1020
        %1022 = vrot.lane.b32.xlu0 %v347, 20
        %v1023 = vpop.permute.xlu0 %1022
        %1024 = vrot.lane.b32.xlu0 %v348, 20
        %v1025 = vpop.permute.xlu0 %1024
        %1026 = vrot.lane.b32.xlu0 %v349, 20
        %v1027 = vpop.permute.xlu0 %1026
        %1028 = vrot.lane.b32.xlu0 %v350, 20
        %v1029 = vpop.permute.xlu0 %1028
        %1030 = vrot.lane.b32.xlu0 %v351, 20
        %v1031 = vpop.permute.xlu0 %1030
        %1032 = vrot.lane.b32.xlu0 %v352, 20
        %v1033 = vpop.permute.xlu0 %1032
        %1034 = vrot.lane.b32.xlu0 %v353, 20
        %v1035 = vpop.permute.xlu0 %1034
        %1036 = vrot.lane.b32.xlu0 %v354, 20
        %v1037 = vpop.permute.xlu0 %1036
        %1038 = vrot.lane.b32.xlu0 %v355, 20
        %v1039 = vpop.permute.xlu0 %1038
        %1040 = vrot.lane.b32.xlu0 %v356, 20
        %v1041 = vpop.permute.xlu0 %1040
        %1042 = vrot.lane.b32.xlu0 %v357, 20
        %v1043 = vpop.permute.xlu0 %1042
        %1044 = vrot.lane.b32.xlu0 %v358, 20
        %v1045 = vpop.permute.xlu0 %1044
        %1046 = vrot.lane.b32.xlu0 %v359, 20
        %v1047 = vpop.permute.xlu0 %1046
        %1048 = vrot.lane.b32.xlu0 %v360, 20
        %v1049 = vpop.permute.xlu0 %1048
        %1050 = vrot.lane.b32.xlu0 %v361, 20
        %v1051 = vpop.permute.xlu0 %1050
        %1052 = vrot.lane.b32.xlu0 %v362, 20
        %v1053 = vpop.permute.xlu0 %1052
        %1054 = vrot.lane.b32.xlu0 %v363, 20
        %v1055 = vpop.permute.xlu0 %1054
        %1056 = vrot.lane.b32.xlu0 %v364, 20
        %v1057 = vpop.permute.xlu0 %1056
        %1058 = vrot.lane.b32.xlu0 %v365, 20
        %v1059 = vpop.permute.xlu0 %1058
        %1060 = vrot.lane.b32.xlu0 %v366, 20
        %v1061 = vpop.permute.xlu0 %1060
        %1062 = vrot.lane.b32.xlu0 %v367, 20
        %v1063 = vpop.permute.xlu0 %1062
        %1064 = vrot.lane.b32.xlu0 %v368, 20
        %v1065 = vpop.permute.xlu0 %1064
        %1066 = vrot.lane.b32.xlu0 %v369, 20
        %v1067 = vpop.permute.xlu0 %1066
        %1068 = vrot.lane.b32.xlu0 %v370, 20
        %v1069 = vpop.permute.xlu0 %1068
        %1070 = vrot.lane.b32.xlu0 %v371, 20
        %v1071 = vpop.permute.xlu0 %1070
        %1072 = vrot.lane.b32.xlu0 %v372, 20
        %v1073 = vpop.permute.xlu0 %1072
        %1074 = vrot.lane.b32.xlu0 %v373, 20
        %v1075 = vpop.permute.xlu0 %1074
        %1076 = vrot.lane.b32.xlu0 %v374, 20
        %v1077 = vpop.permute.xlu0 %1076
        %1078 = vrot.lane.b32.xlu0 %v375, 20
        %v1079 = vpop.permute.xlu0 %1078
        %1080 = vrot.lane.b32.xlu0 %v376, 20
        %v1081 = vpop.permute.xlu0 %1080
        %1146 = vrot.lane.b32.xlu0 %v378, 24
        %v1147 = vpop.permute.xlu0 %1146
        %1148 = vrot.lane.b32.xlu0 %v379, 24
        %v1149 = vpop.permute.xlu0 %1148
        %1150 = vrot.lane.b32.xlu0 %v380, 24
        %v1151 = vpop.permute.xlu0 %1150
        %1152 = vrot.lane.b32.xlu0 %v381, 24
        %v1153 = vpop.permute.xlu0 %1152
        %1154 = vrot.lane.b32.xlu0 %v382, 24
        %v1155 = vpop.permute.xlu0 %1154
        %1156 = vrot.lane.b32.xlu0 %v383, 24
        %v1157 = vpop.permute.xlu0 %1156
        %1158 = vrot.lane.b32.xlu0 %v384, 24
        %v1159 = vpop.permute.xlu0 %1158
        %1160 = vrot.lane.b32.xlu0 %v385, 24
        %v1161 = vpop.permute.xlu0 %1160
        %1162 = vrot.lane.b32.xlu0 %v386, 24
        %v1163 = vpop.permute.xlu0 %1162
        %1164 = vrot.lane.b32.xlu0 %v387, 24
        %v1165 = vpop.permute.xlu0 %1164
        %1166 = vrot.lane.b32.xlu0 %v388, 24
        %v1167 = vpop.permute.xlu0 %1166
        %1168 = vrot.lane.b32.xlu0 %v389, 24
        %v1169 = vpop.permute.xlu0 %1168
        %1170 = vrot.lane.b32.xlu0 %v390, 24
        %v1171 = vpop.permute.xlu0 %1170
        %1172 = vrot.lane.b32.xlu0 %v391, 24
        %v1173 = vpop.permute.xlu0 %1172
        %1174 = vrot.lane.b32.xlu0 %v392, 24
        %v1175 = vpop.permute.xlu0 %1174
        %1176 = vrot.lane.b32.xlu0 %v393, 24
        %v1177 = vpop.permute.xlu0 %1176
        %1178 = vrot.lane.b32.xlu0 %v394, 24
        %v1179 = vpop.permute.xlu0 %1178
        %1180 = vrot.lane.b32.xlu0 %v395, 24
        %v1181 = vpop.permute.xlu0 %1180
        %1182 = vrot.lane.b32.xlu0 %v396, 24
        %v1183 = vpop.permute.xlu0 %1182
        %1184 = vrot.lane.b32.xlu0 %v397, 24
        %v1185 = vpop.permute.xlu0 %1184
        %1186 = vrot.lane.b32.xlu0 %v398, 24
        %v1187 = vpop.permute.xlu0 %1186
        %1188 = vrot.lane.b32.xlu0 %v399, 24
        %v1189 = vpop.permute.xlu0 %1188
        %1190 = vrot.lane.b32.xlu0 %v400, 24
        %v1191 = vpop.permute.xlu0 %1190
        %1192 = vrot.lane.b32.xlu0 %v401, 24
        %v1193 = vpop.permute.xlu0 %1192
        %1194 = vrot.lane.b32.xlu0 %v402, 24
        %v1195 = vpop.permute.xlu0 %1194
        %1196 = vrot.lane.b32.xlu0 %v403, 24
        %v1197 = vpop.permute.xlu0 %1196
        %1198 = vrot.lane.b32.xlu0 %v404, 24
        %v1199 = vpop.permute.xlu0 %1198
        %1200 = vrot.lane.b32.xlu0 %v405, 24
        %v1201 = vpop.permute.xlu0 %1200
        %1202 = vrot.lane.b32.xlu0 %v406, 24
        %v1203 = vpop.permute.xlu0 %1202
        %1204 = vrot.lane.b32.xlu0 %v407, 24
        %v1205 = vpop.permute.xlu0 %1204
        %1206 = vrot.lane.b32.xlu0 %v408, 24
        %v1207 = vpop.permute.xlu0 %1206
        %1208 = vrot.lane.b32.xlu0 %v409, 24
        %v1209 = vpop.permute.xlu0 %1208
        %1274 = vrot.lane.b32.xlu0 %v410, 28
        %v1275 = vpop.permute.xlu0 %1274
        %1276 = vrot.lane.b32.xlu0 %v411, 28
        %v1277 = vpop.permute.xlu0 %1276
        %1278 = vrot.lane.b32.xlu0 %v412, 28
        %v1279 = vpop.permute.xlu0 %1278
        %1280 = vrot.lane.b32.xlu0 %v413, 28
        %v1281 = vpop.permute.xlu0 %1280
        %1282 = vrot.lane.b32.xlu0 %v414, 28
        %v1283 = vpop.permute.xlu0 %1282
        %1284 = vrot.lane.b32.xlu0 %v415, 28
        %v1285 = vpop.permute.xlu0 %1284
        %1286 = vrot.lane.b32.xlu0 %v416, 28
        %v1287 = vpop.permute.xlu0 %1286
        %1288 = vrot.lane.b32.xlu0 %v417, 28
        %v1289 = vpop.permute.xlu0 %1288
        %1290 = vrot.lane.b32.xlu0 %v418, 28
        %v1291 = vpop.permute.xlu0 %1290
        %1292 = vrot.lane.b32.xlu0 %v419, 28
        %v1293 = vpop.permute.xlu0 %1292
        %1294 = vrot.lane.b32.xlu0 %v420, 28
        %v1295 = vpop.permute.xlu0 %1294
        %1296 = vrot.lane.b32.xlu0 %v421, 28
        %v1297 = vpop.permute.xlu0 %1296
        %1298 = vrot.lane.b32.xlu0 %v422, 28
        %v1299 = vpop.permute.xlu0 %1298
        %1300 = vrot.lane.b32.xlu0 %v423, 28
        %v1301 = vpop.permute.xlu0 %1300
        %1302 = vrot.lane.b32.xlu0 %v424, 28
        %v1303 = vpop.permute.xlu0 %1302
        %1304 = vrot.lane.b32.xlu0 %v425, 28
        %v1305 = vpop.permute.xlu0 %1304
        %1306 = vrot.lane.b32.xlu0 %v426, 28
        %v1307 = vpop.permute.xlu0 %1306
        %1308 = vrot.lane.b32.xlu0 %v427, 28
        %v1309 = vpop.permute.xlu0 %1308
        %1310 = vrot.lane.b32.xlu0 %v428, 28
        %v1311 = vpop.permute.xlu0 %1310
        %1312 = vrot.lane.b32.xlu0 %v429, 28
        %v1313 = vpop.permute.xlu0 %1312
        %1314 = vrot.lane.b32.xlu0 %v430, 28
        %v1315 = vpop.permute.xlu0 %1314
        %1316 = vrot.lane.b32.xlu0 %v431, 28
        %v1317 = vpop.permute.xlu0 %1316
        %1318 = vrot.lane.b32.xlu0 %v432, 28
        %v1319 = vpop.permute.xlu0 %1318
        %1320 = vrot.lane.b32.xlu0 %v433, 28
        %v1321 = vpop.permute.xlu0 %1320
        %1322 = vrot.lane.b32.xlu0 %v434, 28
        %v1323 = vpop.permute.xlu0 %1322
        %1324 = vrot.lane.b32.xlu0 %v435, 28
        %v1325 = vpop.permute.xlu0 %1324
        %1326 = vrot.lane.b32.xlu0 %v436, 28
        %v1327 = vpop.permute.xlu0 %1326
        %1328 = vrot.lane.b32.xlu0 %v437, 28
        %v1329 = vpop.permute.xlu0 %1328
        %1330 = vrot.lane.b32.xlu0 %v438, 28
        %v1331 = vpop.permute.xlu0 %1330
        %1332 = vrot.lane.b32.xlu0 %v439, 28
        %v1333 = vpop.permute.xlu0 %1332
        %1334 = vrot.lane.b32.xlu0 %v440, 28
        %v1335 = vpop.permute.xlu0 %1334
        %1336 = vrot.lane.b32.xlu0 %v441, 28
        %v1337 = vpop.permute.xlu0 %1336
        %1402 = vrot.lane.b32.xlu0 %v442, 32
        %v1403 = vpop.permute.xlu0 %1402
        %1404 = vrot.lane.b32.xlu0 %v443, 32
        %v1405 = vpop.permute.xlu0 %1404
        %1406 = vrot.lane.b32.xlu0 %v444, 32
        %v1407 = vpop.permute.xlu0 %1406
        %1408 = vrot.lane.b32.xlu0 %v445, 32
        %v1409 = vpop.permute.xlu0 %1408
        %1410 = vrot.lane.b32.xlu0 %v446, 32
        %v1411 = vpop.permute.xlu0 %1410
        %1412 = vrot.lane.b32.xlu0 %v447, 32
        %v1413 = vpop.permute.xlu0 %1412
        %1414 = vrot.lane.b32.xlu0 %v448, 32
        %v1415 = vpop.permute.xlu0 %1414
        %1416 = vrot.lane.b32.xlu0 %v449, 32
        %v1417 = vpop.permute.xlu0 %1416
        %1418 = vrot.lane.b32.xlu0 %v450, 32
        %v1419 = vpop.permute.xlu0 %1418
        %1420 = vrot.lane.b32.xlu0 %v451, 32
        %v1421 = vpop.permute.xlu0 %1420
        %1422 = vrot.lane.b32.xlu0 %v452, 32
        %v1423 = vpop.permute.xlu0 %1422
        %1424 = vrot.lane.b32.xlu0 %v453, 32
        %v1425 = vpop.permute.xlu0 %1424
        %1426 = vrot.lane.b32.xlu0 %v454, 32
        %v1427 = vpop.permute.xlu0 %1426
        %1428 = vrot.lane.b32.xlu0 %v455, 32
        %v1429 = vpop.permute.xlu0 %1428
        %1430 = vrot.lane.b32.xlu0 %v456, 32
        %v1431 = vpop.permute.xlu0 %1430
        %1432 = vrot.lane.b32.xlu0 %v457, 32
        %v1433 = vpop.permute.xlu0 %1432
        %1434 = vrot.lane.b32.xlu0 %v458, 32
        %v1435 = vpop.permute.xlu0 %1434
        %1436 = vrot.lane.b32.xlu0 %v459, 32
        %v1437 = vpop.permute.xlu0 %1436
        %1438 = vrot.lane.b32.xlu0 %v460, 32
        %v1439 = vpop.permute.xlu0 %1438
        %1440 = vrot.lane.b32.xlu0 %v461, 32
        %v1441 = vpop.permute.xlu0 %1440
        %1442 = vrot.lane.b32.xlu0 %v462, 32
        %v1443 = vpop.permute.xlu0 %1442
        %1444 = vrot.lane.b32.xlu0 %v463, 32
        %v1445 = vpop.permute.xlu0 %1444
        %1446 = vrot.lane.b32.xlu0 %v464, 32
        %v1447 = vpop.permute.xlu0 %1446
        %1448 = vrot.lane.b32.xlu0 %v465, 32
        %v1449 = vpop.permute.xlu0 %1448
        %1450 = vrot.lane.b32.xlu0 %v466, 32
        %v1451 = vpop.permute.xlu0 %1450
        %1452 = vrot.lane.b32.xlu0 %v467, 32
        %v1453 = vpop.permute.xlu0 %1452
        %1454 = vrot.lane.b32.xlu0 %v468, 32
        %v1455 = vpop.permute.xlu0 %1454
        %1456 = vrot.lane.b32.xlu0 %v469, 32
        %v1457 = vpop.permute.xlu0 %1456
        %1458 = vrot.lane.b32.xlu0 %v470, 32
        %v1459 = vpop.permute.xlu0 %1458
        %1460 = vrot.lane.b32.xlu0 %v471, 32
        %v1461 = vpop.permute.xlu0 %1460
        %1462 = vrot.lane.b32.xlu0 %v472, 32
        %v1463 = vpop.permute.xlu0 %1462
        %1464 = vrot.lane.b32.xlu0 %v473, 32
        %v1465 = vpop.permute.xlu0 %1464
        %vm1498 = vcmask 31744
        %v1499 = vsel %vm1498, %v184, %v507
        %v1500 = vsel %vm1498, %v185, %v509
        %v1501 = vsel %vm1498, %v186, %v511
        %v1502 = vsel %vm1498, %v187, %v513
        %v1503 = vsel %vm1498, %v188, %v515
        %v1504 = vsel %vm1498, %v189, %v517
        %v1505 = vsel %vm1498, %v190, %v519
        %v1506 = vsel %vm1498, %v191, %v521
        %v1507 = vsel %vm1498, %v192, %v523
        %v1508 = vsel %vm1498, %v193, %v525
        %v1509 = vsel %vm1498, %v194, %v527
        %v1510 = vsel %vm1498, %v195, %v529
        %v1511 = vsel %vm1498, %v196, %v531
        %v1512 = vsel %vm1498, %v197, %v533
        %v1513 = vsel %vm1498, %v198, %v535
        %v1514 = vsel %vm1498, %v199, %v537
        %v1515 = vsel %vm1498, %v200, %v539
        %v1516 = vsel %vm1498, %v201, %v541
        %v1517 = vsel %vm1498, %v202, %v543
        %v1518 = vsel %vm1498, %v203, %v545
        %v1519 = vsel %vm1498, %v204, %v547
        %v1520 = vsel %vm1498, %v205, %v549
        %v1521 = vsel %vm1498, %v206, %v551
        %v1522 = vsel %vm1498, %v207, %v553
        %v1523 = vsel %vm1498, %v208, %v555
        %v1524 = vsel %vm1498, %v209, %v557
        %v1525 = vsel %vm1498, %v210, %v559
        %v1526 = vsel %vm1498, %v211, %v561
        %v1527 = vsel %vm1498, %v212, %v563
        %v1528 = vsel %vm1498, %v213, %v565
        %v1529 = vsel %vm1498, %v214, %v567
        %v1530 = vsel %vm1498, %v215, %v569
        %vm1531 = vcmask 64512
        %v1532 = vsel %vm1531, %v1499, %v635
        %v1533 = vsel %vm1531, %v1500, %v637
        %v1534 = vsel %vm1531, %v1501, %v639
        %v1535 = vsel %vm1531, %v1502, %v641
        %v1536 = vsel %vm1531, %v1503, %v643
        %v1537 = vsel %vm1531, %v1504, %v645
        %v1538 = vsel %vm1531, %v1505, %v647
        %v1539 = vsel %vm1531, %v1506, %v649
        %v1540 = vsel %vm1531, %v1507, %v651
        %v1541 = vsel %vm1531, %v1508, %v653
        %v1542 = vsel %vm1531, %v1509, %v655
        %v1543 = vsel %vm1531, %v1510, %v657
        %v1544 = vsel %vm1531, %v1511, %v659
        %v1545 = vsel %vm1531, %v1512, %v661
        %v1546 = vsel %vm1531, %v1513, %v663
        %v1547 = vsel %vm1531, %v1514, %v665
        %v1548 = vsel %vm1531, %v1515, %v667
        %v1549 = vsel %vm1531, %v1516, %v669
        %v1550 = vsel %vm1531, %v1517, %v671
        %v1551 = vsel %vm1531, %v1518, %v673
        %v1552 = vsel %vm1531, %v1519, %v675
        %v1553 = vsel %vm1531, %v1520, %v677
        %v1554 = vsel %vm1531, %v1521, %v679
        %v1555 = vsel %vm1531, %v1522, %v681
        %v1556 = vsel %vm1531, %v1523, %v683
        %v1557 = vsel %vm1531, %v1524, %v685
        %v1558 = vsel %vm1531, %v1525, %v687
        %v1559 = vsel %vm1531, %v1526, %v689
        %v1560 = vsel %vm1531, %v1527, %v691
        %v1561 = vsel %vm1531, %v1528, %v693
        %v1562 = vsel %vm1531, %v1529, %v695
        %v1563 = vsel %vm1531, %v1530, %v697
        %vm1564 = vcmask 97280
        %v1565 = vsel %vm1564, %v1532, %v763
        %v1566 = vsel %vm1564, %v1533, %v765
        %v1567 = vsel %vm1564, %v1534, %v767
        %v1568 = vsel %vm1564, %v1535, %v769
        %v1569 = vsel %vm1564, %v1536, %v771
        %v1570 = vsel %vm1564, %v1537, %v773
        %v1571 = vsel %vm1564, %v1538, %v775
        %v1572 = vsel %vm1564, %v1539, %v777
        %v1573 = vsel %vm1564, %v1540, %v779
        %v1574 = vsel %vm1564, %v1541, %v781
        %v1575 = vsel %vm1564, %v1542, %v783
        %v1576 = vsel %vm1564, %v1543, %v785
        %v1577 = vsel %vm1564, %v1544, %v787
        %v1578 = vsel %vm1564, %v1545, %v789
        %v1579 = vsel %vm1564, %v1546, %v791
        %v1580 = vsel %vm1564, %v1547, %v793
        %v1581 = vsel %vm1564, %v1548, %v795
        %v1582 = vsel %vm1564, %v1549, %v797
        %v1583 = vsel %vm1564, %v1550, %v799
        %v1584 = vsel %vm1564, %v1551, %v801
        %v1585 = vsel %vm1564, %v1552, %v803
        %v1586 = vsel %vm1564, %v1553, %v805
        %v1587 = vsel %vm1564, %v1554, %v807
        %v1588 = vsel %vm1564, %v1555, %v809
        %v1589 = vsel %vm1564, %v1556, %v811
        %v1590 = vsel %vm1564, %v1557, %v813
        %v1591 = vsel %vm1564, %v1558, %v815
        %v1592 = vsel %vm1564, %v1559, %v817
        %v1593 = vsel %vm1564, %v1560, %v819
        %v1594 = vsel %vm1564, %v1561, %v821
        %v1595 = vsel %vm1564, %v1562, %v823
        %v1596 = vsel %vm1564, %v1563, %v825
        %vm1597 = vcmask 130048
        %v1598 = vsel %vm1597, %v1565, %v891
        %v1599 = vsel %vm1597, %v1566, %v893
        %v1600 = vsel %vm1597, %v1567, %v895
        %v1601 = vsel %vm1597, %v1568, %v897
        %v1602 = vsel %vm1597, %v1569, %v899
        %v1603 = vsel %vm1597, %v1570, %v901
        %v1604 = vsel %vm1597, %v1571, %v903
        %v1605 = vsel %vm1597, %v1572, %v905
        %v1606 = vsel %vm1597, %v1573, %v907
        %v1607 = vsel %vm1597, %v1574, %v909
        %v1608 = vsel %vm1597, %v1575, %v911
        %v1609 = vsel %vm1597, %v1576, %v913
        %v1610 = vsel %vm1597, %v1577, %v915
        %v1611 = vsel %vm1597, %v1578, %v917
        %v1612 = vsel %vm1597, %v1579, %v919
        %v1613 = vsel %vm1597, %v1580, %v921
        %v1614 = vsel %vm1597, %v1581, %v923
        %v1615 = vsel %vm1597, %v1582, %v925
        %v1616 = vsel %vm1597, %v1583, %v927
        %v1617 = vsel %vm1597, %v1584, %v929
        %v1618 = vsel %vm1597, %v1585, %v931
        %v1619 = vsel %vm1597, %v1586, %v933
        %v1620 = vsel %vm1597, %v1587, %v935
        %v1621 = vsel %vm1597, %v1588, %v937
        %v1622 = vsel %vm1597, %v1589, %v939
        %v1623 = vsel %vm1597, %v1590, %v941
        %v1624 = vsel %vm1597, %v1591, %v943
        %v1625 = vsel %vm1597, %v1592, %v945
        %v1626 = vsel %vm1597, %v1593, %v947
        %v1627 = vsel %vm1597, %v1594, %v949
        %v1628 = vsel %vm1597, %v1595, %v951
        %v1629 = vsel %vm1597, %v1596, %v953
        %vm1630 = vcmask 162816
        %v1631 = vsel %vm1630, %v1598, %v1019
        %v1632 = vsel %vm1630, %v1599, %v1021
        %v1633 = vsel %vm1630, %v1600, %v1023
        %v1634 = vsel %vm1630, %v1601, %v1025
        %v1635 = vsel %vm1630, %v1602, %v1027
        %v1636 = vsel %vm1630, %v1603, %v1029
        %v1637 = vsel %vm1630, %v1604, %v1031
        %v1638 = vsel %vm1630, %v1605, %v1033
        %v1639 = vsel %vm1630, %v1606, %v1035
        %v1640 = vsel %vm1630, %v1607, %v1037
        %v1641 = vsel %vm1630, %v1608, %v1039
        %v1642 = vsel %vm1630, %v1609, %v1041
        %v1643 = vsel %vm1630, %v1610, %v1043
        %v1644 = vsel %vm1630, %v1611, %v1045
        %v1645 = vsel %vm1630, %v1612, %v1047
        %v1646 = vsel %vm1630, %v1613, %v1049
        %v1647 = vsel %vm1630, %v1614, %v1051
        %v1648 = vsel %vm1630, %v1615, %v1053
        %v1649 = vsel %vm1630, %v1616, %v1055
        %v1650 = vsel %vm1630, %v1617, %v1057
        %v1651 = vsel %vm1630, %v1618, %v1059
        %v1652 = vsel %vm1630, %v1619, %v1061
        %v1653 = vsel %vm1630, %v1620, %v1063
        %v1654 = vsel %vm1630, %v1621, %v1065
        %v1655 = vsel %vm1630, %v1622, %v1067
        %v1656 = vsel %vm1630, %v1623, %v1069
        %v1657 = vsel %vm1630, %v1624, %v1071
        %v1658 = vsel %vm1630, %v1625, %v1073
        %v1659 = vsel %vm1630, %v1626, %v1075
        %v1660 = vsel %vm1630, %v1627, %v1077
        %v1661 = vsel %vm1630, %v1628, %v1079
        %v1662 = vsel %vm1630, %v1629, %v1081
        %vm1663 = vcmask 195584
        %v1664 = vsel %vm1663, %v1631, %v1147
        %v1665 = vsel %vm1663, %v1632, %v1149
        %v1666 = vsel %vm1663, %v1633, %v1151
        %v1667 = vsel %vm1663, %v1634, %v1153
        %v1668 = vsel %vm1663, %v1635, %v1155
        %v1669 = vsel %vm1663, %v1636, %v1157
        %v1670 = vsel %vm1663, %v1637, %v1159
        %v1671 = vsel %vm1663, %v1638, %v1161
        %v1672 = vsel %vm1663, %v1639, %v1163
        %v1673 = vsel %vm1663, %v1640, %v1165
        %v1674 = vsel %vm1663, %v1641, %v1167
        %v1675 = vsel %vm1663, %v1642, %v1169
        %v1676 = vsel %vm1663, %v1643, %v1171
        %v1677 = vsel %vm1663, %v1644, %v1173
        %v1678 = vsel %vm1663, %v1645, %v1175
        %v1679 = vsel %vm1663, %v1646, %v1177
        %v1680 = vsel %vm1663, %v1647, %v1179
        %v1681 = vsel %vm1663, %v1648, %v1181
        %v1682 = vsel %vm1663, %v1649, %v1183
        %v1683 = vsel %vm1663, %v1650, %v1185
        %v1684 = vsel %vm1663, %v1651, %v1187
        %v1685 = vsel %vm1663, %v1652, %v1189
        %v1686 = vsel %vm1663, %v1653, %v1191
        %v1687 = vsel %vm1663, %v1654, %v1193
        %v1688 = vsel %vm1663, %v1655, %v1195
        %v1689 = vsel %vm1663, %v1656, %v1197
        %v1690 = vsel %vm1663, %v1657, %v1199
        %v1691 = vsel %vm1663, %v1658, %v1201
        %v1692 = vsel %vm1663, %v1659, %v1203
        %v1693 = vsel %vm1663, %v1660, %v1205
        %v1694 = vsel %vm1663, %v1661, %v1207
        %v1695 = vsel %vm1663, %v1662, %v1209
        %vm1696 = vcmask 228352
        %v1697 = vsel %vm1696, %v1664, %v1275
        %v1698 = vsel %vm1696, %v1665, %v1277
        %v1699 = vsel %vm1696, %v1666, %v1279
        %v1700 = vsel %vm1696, %v1667, %v1281
        %v1701 = vsel %vm1696, %v1668, %v1283
        %v1702 = vsel %vm1696, %v1669, %v1285
        %v1703 = vsel %vm1696, %v1670, %v1287
        %v1704 = vsel %vm1696, %v1671, %v1289
        %v1705 = vsel %vm1696, %v1672, %v1291
        %v1706 = vsel %vm1696, %v1673, %v1293
        %v1707 = vsel %vm1696, %v1674, %v1295
        %v1708 = vsel %vm1696, %v1675, %v1297
        %v1709 = vsel %vm1696, %v1676, %v1299
        %v1710 = vsel %vm1696, %v1677, %v1301
        %v1711 = vsel %vm1696, %v1678, %v1303
        %v1712 = vsel %vm1696, %v1679, %v1305
        %v1713 = vsel %vm1696, %v1680, %v1307
        %v1714 = vsel %vm1696, %v1681, %v1309
        %v1715 = vsel %vm1696, %v1682, %v1311
        %v1716 = vsel %vm1696, %v1683, %v1313
        %v1717 = vsel %vm1696, %v1684, %v1315
        %v1718 = vsel %vm1696, %v1685, %v1317
        %v1719 = vsel %vm1696, %v1686, %v1319
        %v1720 = vsel %vm1696, %v1687, %v1321
        %v1721 = vsel %vm1696, %v1688, %v1323
        %v1722 = vsel %vm1696, %v1689, %v1325
        %v1723 = vsel %vm1696, %v1690, %v1327
        %v1724 = vsel %vm1696, %v1691, %v1329
        %v1725 = vsel %vm1696, %v1692, %v1331
        %v1726 = vsel %vm1696, %v1693, %v1333
        %v1727 = vsel %vm1696, %v1694, %v1335
        %v1728 = vsel %vm1696, %v1695, %v1337
        %vm1729 = vcmask 261120
        %v1730 = vsel %vm1729, %v1697, %v1403
        %v1731 = vsel %vm1729, %v1698, %v1405
        %v1732 = vsel %vm1729, %v1699, %v1407
        %v1733 = vsel %vm1729, %v1700, %v1409
        %v1734 = vsel %vm1729, %v1701, %v1411
        %v1735 = vsel %vm1729, %v1702, %v1413
        %v1736 = vsel %vm1729, %v1703, %v1415
        %v1737 = vsel %vm1729, %v1704, %v1417
        %v1738 = vsel %vm1729, %v1705, %v1419
        %v1739 = vsel %vm1729, %v1706, %v1421
        %v1740 = vsel %vm1729, %v1707, %v1423
        %v1741 = vsel %vm1729, %v1708, %v1425
        %v1742 = vsel %vm1729, %v1709, %v1427
        %v1743 = vsel %vm1729, %v1710, %v1429
        %v1744 = vsel %vm1729, %v1711, %v1431
        %v1745 = vsel %vm1729, %v1712, %v1433
        %v1746 = vsel %vm1729, %v1713, %v1435
        %v1747 = vsel %vm1729, %v1714, %v1437
        %v1748 = vsel %vm1729, %v1715, %v1439
        %v1749 = vsel %vm1729, %v1716, %v1441
        %v1750 = vsel %vm1729, %v1717, %v1443
        %v1751 = vsel %vm1729, %v1718, %v1445
        %v1752 = vsel %vm1729, %v1719, %v1447
        %v1753 = vsel %vm1729, %v1720, %v1449
        %v1754 = vsel %vm1729, %v1721, %v1451
        %v1755 = vsel %vm1729, %v1722, %v1453
        %v1756 = vsel %vm1729, %v1723, %v1455
        %v1757 = vsel %vm1729, %v1724, %v1457
        %v1758 = vsel %vm1729, %v1725, %v1459
        %v1759 = vsel %vm1729, %v1726, %v1461
        %v1760 = vsel %vm1729, %v1727, %v1463
        %v1761 = vsel %vm1729, %v1728, %v1465
        %v1762 = vld [vmem:[%s1] sm:$0xff]
        %v1763 = vld [vmem:[%s1 + $0x8] sm:$0xff]
        %v1764 = vld [vmem:[%s1 + $0x10] sm:$0xff]
        %v1765 = vld [vmem:[%s1 + $0x18] sm:$0xff]
        %v1766 = vld [vmem:[%s1 + $0x20] sm:$0xf]
        %v1767 = vld [vmem:[%s2] sm:$0x1]
        %v1769 = vlaneseq
        %v1770 = vshrl.u32 %v1769, 7
        %v1771 = vsub.s32 0, %v1770
        %v1772 = vrot.slane %v1767, %v1771
        %vm1774 = vcmask 293888
        %v1776 = vsel %vm1774, %v1730, 0
        %v1779 = vsel %vm1774, %v1731, 0
        %v1782 = vsel %vm1774, %v1732, 0
        %v1785 = vsel %vm1774, %v1733, 0
        %v1788 = vsel %vm1774, %v1734, 0
        %v1791 = vsel %vm1774, %v1735, 0
        %v1794 = vsel %vm1774, %v1736, 0
        %v1797 = vsel %vm1774, %v1737, 0
        %v1800 = vsel %vm1774, %v1738, 0
        %v1803 = vsel %vm1774, %v1739, 0
        %v1806 = vsel %vm1774, %v1740, 0
        %v1809 = vsel %vm1774, %v1741, 0
        %v1812 = vsel %vm1774, %v1742, 0
        %v1815 = vsel %vm1774, %v1743, 0
        %v1818 = vsel %vm1774, %v1744, 0
        %v1821 = vsel %vm1774, %v1745, 0
        %v1824 = vsel %vm1774, %v1746, 0
        %v1827 = vsel %vm1774, %v1747, 0
        %v1830 = vsel %vm1774, %v1748, 0
        %v1833 = vsel %vm1774, %v1749, 0
        %v1836 = vsel %vm1774, %v1750, 0
        %v1839 = vsel %vm1774, %v1751, 0
        %v1842 = vsel %vm1774, %v1752, 0
        %v1845 = vsel %vm1774, %v1753, 0
        %v1848 = vsel %vm1774, %v1754, 0
        %v1851 = vsel %vm1774, %v1755, 0
        %v1854 = vsel %vm1774, %v1756, 0
        %v1857 = vsel %vm1774, %v1757, 0
        %v1860 = vsel %vm1774, %v1758, 0
        %v1863 = vsel %vm1774, %v1759, 0
        %v1866 = vsel %vm1774, %v1760, 0
        %v1869 = vsel %vm1774, %v1761, 0
        %vm1871 = vcmask 1043456
        %v1873 = vsel %vm1871, %v1766, 0
        %1875 = vmatprep.subr.mxu0 0.0
        %1876 = vmatpush1.msra.mxu0 0.0
        %1877 = vmatprep.subr.mxu0 0.0
        %1878 = vmatpush1.msra.mxu0 0.0
        %1879 = vmatprep.subr.mxu0 0.0
        %1880 = vmatpush1.msra.mxu0 0.0
        %1881 = vmatprep.subr.mxu0 0.0
        %1882 = vmatpush1.msra.mxu0 0.0
        %1883 = vmatprep.subr.mxu0 0.0
        %1884 = vmatpush1.msra.mxu0 0.0
        %1885 = vmatprep.subr.mxu0 0.0
        %1886 = vmatpush1.msra.mxu0 0.0
        %1887 = vmatprep.subr.mxu0 0.0
        %1888 = vmatpush1.msra.mxu0 0.0
        %1889 = vmatprep.subr.mxu0 0.0
        %1890 = vmatpush1.msra.mxu0 0.0
        %1891 = vmatprep.subr.mxu0 0.0
        %1892 = vmatpush1.msra.mxu0 0.0
        %1893 = vmatprep.subr.mxu0 0.0
        %1894 = vmatpush1.msra.mxu0 0.0
        %1895 = vmatprep.subr.mxu0 0.0
        %1896 = vmatpush1.msra.mxu0 0.0
        %1897 = vmatprep.subr.mxu0 0.0
        %1898 = vmatpush1.msra.mxu0 %v1873
        %1899 = vmatprep.subr.mxu0 0.0
        %1900 = vmatpush1.msra.mxu0 %v1765
        %1901 = vmatprep.subr.mxu0 0.0
        %1902 = vmatpush1.msra.mxu0 %v1764
        %1903 = vmatprep.subr.mxu0 0.0
        %1904 = vmatpush1.msra.mxu0 %v1763
        %1905 = vmatprep.subr.mxu0 0.0
        %1906 = vmatpush1.msra.mxu0 %v1762
        %1907 = vmatprep.subr.mxu0 0.0
        %1908 = vmatpush2.msra.mxu0 0.0
        %1909 = vmatprep.subr.mxu0 0.0
        %1910 = vmatpush2.msra.mxu0 0.0
        %1911 = vmatprep.subr.mxu0 0.0
        %1912 = vmatpush2.msra.mxu0 0.0
        %1913 = vmatprep.subr.mxu0 0.0
        %1914 = vmatpush2.msra.mxu0 0.0
        %1915 = vmatprep.subr.mxu0 0.0
        %1916 = vmatpush2.msra.mxu0 0.0
        %1917 = vmatprep.subr.mxu0 0.0
        %1918 = vmatpush2.msra.mxu0 0.0
        %1919 = vmatprep.subr.mxu0 0.0
        %1920 = vmatpush2.msra.mxu0 0.0
        %1921 = vmatprep.subr.mxu0 0.0
        %1922 = vmatpush2.msra.mxu0 0.0
        %1923 = vmatprep.subr.mxu0 0.0
        %1924 = vmatpush2.msra.mxu0 0.0
        %1925 = vmatprep.subr.mxu0 0.0
        %1926 = vmatpush2.msra.mxu0 0.0
        %1927 = vmatprep.subr.mxu0 0.0
        %1928 = vmatpush2.msra.mxu0 0.0
        %1929 = vmatprep.subr.mxu0 0.0
        %1930 = vmatpush2.msra.mxu0 0.0
        %1931 = vmatprep.subr.mxu0 0.0
        %1932 = vmatpush2.msra.mxu0 0.0
        %1933 = vmatprep.subr.mxu0 0.0
        %1934 = vmatpush2.msra.mxu0 0.0
        %1935 = vmatprep.subr.mxu0 0.0
        %1936 = vmatpush2.msra.mxu0 0.0
        %1937 = vmatprep.subr.mxu0 0.0
        %1938 = vmatpush2.msra.mxu0 0.0
        %1939 = vmatprep.mubr.f32.mxu0 0.0
        %1940 = vmatmul.mubr.f32.gmra.mxu0 %v1776
        %v1941 = vpop.f32.mrf.mxu0
        %v1942 = vadd.f32 %v1772, %v1941
        %v1943 = vpop.f32.mrf.mxu0
        %1944 = vmatprep.mubr.f32.mxu0 0.0
        %1945 = vmatmul.mubr.f32.gmra.mxu0 %v1779
        %v1946 = vpop.f32.mrf.mxu0
        %v1947 = vadd.f32 %v1772, %v1946
        %v1948 = vpop.f32.mrf.mxu0
        %1949 = vmatprep.mubr.f32.mxu0 0.0
        %1950 = vmatmul.mubr.f32.gmra.mxu0 %v1782
        %v1951 = vpop.f32.mrf.mxu0
        %v1952 = vadd.f32 %v1772, %v1951
        %v1953 = vpop.f32.mrf.mxu0
        %1954 = vmatprep.mubr.f32.mxu0 0.0
        %1955 = vmatmul.mubr.f32.gmra.mxu0 %v1785
        %v1956 = vpop.f32.mrf.mxu0
        %v1957 = vadd.f32 %v1772, %v1956
        %v1958 = vpop.f32.mrf.mxu0
        %1959 = vmatprep.mubr.f32.mxu0 0.0
        %1960 = vmatmul.mubr.f32.gmra.mxu0 %v1788
        %v1961 = vpop.f32.mrf.mxu0
        %v1962 = vadd.f32 %v1772, %v1961
        %v1963 = vpop.f32.mrf.mxu0
        %1964 = vmatprep.mubr.f32.mxu0 0.0
        %1965 = vmatmul.mubr.f32.gmra.mxu0 %v1791
        %v1966 = vpop.f32.mrf.mxu0
        %v1967 = vadd.f32 %v1772, %v1966
        %v1968 = vpop.f32.mrf.mxu0
        %1969 = vmatprep.mubr.f32.mxu0 0.0
        %1970 = vmatmul.mubr.f32.gmra.mxu0 %v1794
        %v1971 = vpop.f32.mrf.mxu0
        %v1972 = vadd.f32 %v1772, %v1971
        %v1973 = vpop.f32.mrf.mxu0
        %1974 = vmatprep.mubr.f32.mxu0 0.0
        %1975 = vmatmul.mubr.f32.gmra.mxu0 %v1797
        %v1976 = vpop.f32.mrf.mxu0
        %v1977 = vadd.f32 %v1772, %v1976
        %v1978 = vpop.f32.mrf.mxu0
        %1979 = vmatprep.mubr.f32.mxu0 0.0
        %1980 = vmatmul.mubr.f32.gmra.mxu0 %v1800
        %v1981 = vpop.f32.mrf.mxu0
        %v1982 = vadd.f32 %v1772, %v1981
        %v1983 = vpop.f32.mrf.mxu0
        %1984 = vmatprep.mubr.f32.mxu0 0.0
        %1985 = vmatmul.mubr.f32.gmra.mxu0 %v1803
        %v1986 = vpop.f32.mrf.mxu0
        %v1987 = vadd.f32 %v1772, %v1986
        %v1988 = vpop.f32.mrf.mxu0
        %1989 = vmatprep.mubr.f32.mxu0 0.0
        %1990 = vmatmul.mubr.f32.gmra.mxu0 %v1806
        %v1991 = vpop.f32.mrf.mxu0
        %v1992 = vadd.f32 %v1772, %v1991
        %v1993 = vpop.f32.mrf.mxu0
        %1994 = vmatprep.mubr.f32.mxu0 0.0
        %1995 = vmatmul.mubr.f32.gmra.mxu0 %v1809
        %v1996 = vpop.f32.mrf.mxu0
        %v1997 = vadd.f32 %v1772, %v1996
        %v1998 = vpop.f32.mrf.mxu0
        %1999 = vmatprep.mubr.f32.mxu0 0.0
        %2000 = vmatmul.mubr.f32.gmra.mxu0 %v1812
        %v2001 = vpop.f32.mrf.mxu0
        %v2002 = vadd.f32 %v1772, %v2001
        %v2003 = vpop.f32.mrf.mxu0
        %2004 = vmatprep.mubr.f32.mxu0 0.0
        %2005 = vmatmul.mubr.f32.gmra.mxu0 %v1815
        %v2006 = vpop.f32.mrf.mxu0
        %v2007 = vadd.f32 %v1772, %v2006
        %v2008 = vpop.f32.mrf.mxu0
        %2009 = vmatprep.mubr.f32.mxu0 0.0
        %2010 = vmatmul.mubr.f32.gmra.mxu0 %v1818
        %v2011 = vpop.f32.mrf.mxu0
        %v2012 = vadd.f32 %v1772, %v2011
        %v2013 = vpop.f32.mrf.mxu0
        %2014 = vmatprep.mubr.f32.mxu0 0.0
        %2015 = vmatmul.mubr.f32.gmra.mxu0 %v1821
        %v2016 = vpop.f32.mrf.mxu0
        %v2017 = vadd.f32 %v1772, %v2016
        %v2018 = vpop.f32.mrf.mxu0
        %2019 = vmatprep.mubr.f32.mxu0 0.0
        %2020 = vmatmul.mubr.f32.gmra.mxu0 %v1824
        %v2021 = vpop.f32.mrf.mxu0
        %v2022 = vadd.f32 %v1772, %v2021
        %v2023 = vpop.f32.mrf.mxu0
        %2024 = vmatprep.mubr.f32.mxu0 0.0
        %2025 = vmatmul.mubr.f32.gmra.mxu0 %v1827
        %v2026 = vpop.f32.mrf.mxu0
        %v2027 = vadd.f32 %v1772, %v2026
        %v2028 = vpop.f32.mrf.mxu0
        %2029 = vmatprep.mubr.f32.mxu0 0.0
        %2030 = vmatmul.mubr.f32.gmra.mxu0 %v1830
        %v2031 = vpop.f32.mrf.mxu0
        %v2032 = vadd.f32 %v1772, %v2031
        %v2033 = vpop.f32.mrf.mxu0
        %2034 = vmatprep.mubr.f32.mxu0 0.0
        %2035 = vmatmul.mubr.f32.gmra.mxu0 %v1833
        %v2036 = vpop.f32.mrf.mxu0
        %v2037 = vadd.f32 %v1772, %v2036
        %v2038 = vpop.f32.mrf.mxu0
        %2039 = vmatprep.mubr.f32.mxu0 0.0
        %2040 = vmatmul.mubr.f32.gmra.mxu0 %v1836
        %v2041 = vpop.f32.mrf.mxu0
        %v2042 = vadd.f32 %v1772, %v2041
        %v2043 = vpop.f32.mrf.mxu0
        %2044 = vmatprep.mubr.f32.mxu0 0.0
        %2045 = vmatmul.mubr.f32.gmra.mxu0 %v1839
        %v2046 = vpop.f32.mrf.mxu0
        %v2047 = vadd.f32 %v1772, %v2046
        %v2048 = vpop.f32.mrf.mxu0
        %2049 = vmatprep.mubr.f32.mxu0 0.0
        %2050 = vmatmul.mubr.f32.gmra.mxu0 %v1842
        %v2051 = vpop.f32.mrf.mxu0
        %v2052 = vadd.f32 %v1772, %v2051
        %v2053 = vpop.f32.mrf.mxu0
        %2054 = vmatprep.mubr.f32.mxu0 0.0
        %2055 = vmatmul.mubr.f32.gmra.mxu0 %v1845
        %v2056 = vpop.f32.mrf.mxu0
        %v2057 = vadd.f32 %v1772, %v2056
        %v2058 = vpop.f32.mrf.mxu0
        %2059 = vmatprep.mubr.f32.mxu0 0.0
        %2060 = vmatmul.mubr.f32.gmra.mxu0 %v1848
        %v2061 = vpop.f32.mrf.mxu0
        %v2062 = vadd.f32 %v1772, %v2061
        %v2063 = vpop.f32.mrf.mxu0
        %2064 = vmatprep.mubr.f32.mxu0 0.0
        %2065 = vmatmul.mubr.f32.gmra.mxu0 %v1851
        %v2066 = vpop.f32.mrf.mxu0
        %v2067 = vadd.f32 %v1772, %v2066
        %v2068 = vpop.f32.mrf.mxu0
        %2069 = vmatprep.mubr.f32.mxu0 0.0
        %2070 = vmatmul.mubr.f32.gmra.mxu0 %v1854
        %v2071 = vpop.f32.mrf.mxu0
        %v2072 = vadd.f32 %v1772, %v2071
        %v2073 = vpop.f32.mrf.mxu0
        %2074 = vmatprep.mubr.f32.mxu0 0.0
        %2075 = vmatmul.mubr.f32.gmra.mxu0 %v1857
        %v2076 = vpop.f32.mrf.mxu0
        %v2077 = vadd.f32 %v1772, %v2076
        %v2078 = vpop.f32.mrf.mxu0
        %2079 = vmatprep.mubr.f32.mxu0 0.0
        %2080 = vmatmul.mubr.f32.gmra.mxu0 %v1860
        %v2081 = vpop.f32.mrf.mxu0
        %v2082 = vadd.f32 %v1772, %v2081
        %v2083 = vpop.f32.mrf.mxu0
        %2084 = vmatprep.mubr.f32.mxu0 0.0
        %2085 = vmatmul.mubr.f32.gmra.mxu0 %v1863
        %v2086 = vpop.f32.mrf.mxu0
        %v2087 = vadd.f32 %v1772, %v2086
        %v2088 = vpop.f32.mrf.mxu0
        %2089 = vmatprep.mubr.f32.mxu0 0.0
        %2090 = vmatmul.mubr.f32.gmra.mxu0 %v1866
        %v2091 = vpop.f32.mrf.mxu0
        %v2092 = vadd.f32 %v1772, %v2091
        %v2093 = vpop.f32.mrf.mxu0
        %2094 = vmatprep.mubr.f32.mxu0 0.0
        %2095 = vmatmul.mubr.f32.gmra.mxu0 %v1869
        %v2096 = vpop.f32.mrf.mxu0
        %v2097 = vadd.f32 %v1772, %v2096
        %v2098 = vpop.f32.mrf.mxu0
        %2099 = vdwg.mxu0
        %2100 = vst [vmem:[%s177] sm:$0xff] %v1942
        %2101 = vst [vmem:[%s177 + $0x8] sm:$0xff] %v1947
        %2102 = vst [vmem:[%s177 + $0x10] sm:$0xff] %v1952
        %2103 = vst [vmem:[%s177 + $0x18] sm:$0xff] %v1957
        %2104 = vst [vmem:[%s177 + $0x20] sm:$0xff] %v1962
        %2105 = vst [vmem:[%s177 + $0x28] sm:$0xff] %v1967
        %2106 = vst [vmem:[%s177 + $0x30] sm:$0xff] %v1972
        %2107 = vst [vmem:[%s177 + $0x38] sm:$0xff] %v1977
        %2108 = vst [vmem:[%s177 + $0x40] sm:$0xff] %v1982
        %2109 = vst [vmem:[%s177 + $0x48] sm:$0xff] %v1987
        %2110 = vst [vmem:[%s177 + $0x50] sm:$0xff] %v1992
        %2111 = vst [vmem:[%s177 + $0x58] sm:$0xff] %v1997
        %2112 = vst [vmem:[%s177 + $0x60] sm:$0xff] %v2002
        %2113 = vst [vmem:[%s177 + $0x68] sm:$0xff] %v2007
        %2114 = vst [vmem:[%s177 + $0x70] sm:$0xff] %v2012
        %2115 = vst [vmem:[%s177 + $0x78] sm:$0xff] %v2017
        %2116 = vst [vmem:[%s177 + $0x80] sm:$0xff] %v2022
        %2117 = vst [vmem:[%s177 + $0x88] sm:$0xff] %v2027
        %2118 = vst [vmem:[%s177 + $0x90] sm:$0xff] %v2032
        %2119 = vst [vmem:[%s177 + $0x98] sm:$0xff] %v2037
        %2120 = vst [vmem:[%s177 + $0xa0] sm:$0xff] %v2042
        %2121 = vst [vmem:[%s177 + $0xa8] sm:$0xff] %v2047
        %2122 = vst [vmem:[%s177 + $0xb0] sm:$0xff] %v2052
        %2123 = vst [vmem:[%s177 + $0xb8] sm:$0xff] %v2057
        %2124 = vst [vmem:[%s177 + $0xc0] sm:$0xff] %v2062
        %2125 = vst [vmem:[%s177 + $0xc8] sm:$0xff] %v2067
        %2126 = vst [vmem:[%s177 + $0xd0] sm:$0xff] %v2072
        %2127 = vst [vmem:[%s177 + $0xd8] sm:$0xff] %v2077
        %2128 = vst [vmem:[%s177 + $0xe0] sm:$0xff] %v2082
        %2129 = vst [vmem:[%s177 + $0xe8] sm:$0xff] %v2087
        %2130 = vst [vmem:[%s177 + $0xf0] sm:$0xff] %v2092
        %2131 = vst [vmem:[%s177 + $0xf8] sm:$0xff] %v2097
        %s2132 = sand.u32 %s107, 1
        %s2133 = scalar_lea.sflag [#allocation3], %s2132
        %s2134 = sand.u32 %s107, 1
        %s2135 = smul.addr %s2134, 256
        %s2136 = scalar_lea.vmem [#allocation2], %s2135
        // Predicated region
        $region33: #{tpu_custom_call.1} parent=31 // pred_check
          %p2137 = pneg %p117
        $region34: #{tpu_custom_call.1} parent=31 // pred_check_branch
          %2139 = sbr.rel (%p2137) target = $region36
        $region35: #{tpu_custom_call.1} parent=31 // pred_region
          %s2140 = smul.u32 16, %s22
          %s2142 = ssub.s32 4096, 4096
          %2143 = vsyncadd %s2133, %s2142
          %s2144 = smul.addr %s2140, 2
          %s2145 = smul.addr %s21, 32
          %s2146 = sadd.s32 %s2144, %s2145
          %s2147 = smul.addr %s2146, 128
          %s2148 = scalar_lea.hbm %s3, %s2147
          %s2149 = sshll.u32 %s2136, 4
          %s2150 = int_to_ptr.vmem [resolvable:$true] %s2149
          %2155 = dma.vmem_to_hbm [thread:$0]  %s2150, 4096, %s2148, %s2133, 128, 128, 8
        $region36: #{tpu_custom_call.1} parent=31 // pred_fallthru
          _
      $region32: #{tpu_custom_call.1} parent=5 // pred_fallthru
        _
      %p2156 = scmp.le.s32.totalorder 2, %s12
      // Predicated region
      $region37: #{tpu_custom_call.1} parent=5 // pred_check
        %p2157 = pneg %p2156
      $region38: #{tpu_custom_call.1} parent=5 // pred_check_branch
        %2159 = sbr.rel (%p2157) target = $region40
      $region39: #{tpu_custom_call.1} parent=5 // pred_region
        %s2160 = ssub.s32 %s12, 2
        // Predicated region
        $region41: #{tpu_custom_call.1} parent=39 // pred_check
          %p2161 = pneg %p123
        $region42: #{tpu_custom_call.1} parent=39 // pred_check_branch
          %2163 = sbr.rel (%p2161) target = $region44
        $region43: #{tpu_custom_call.1} parent=39 // pred_region
          %s2164 = sand.u32 %s108, 1
          %s2165 = scalar_lea.sflag [#allocation3], %s2164
          %s2166 = sand.u32 %s108, 1
          %s2167 = smul.addr %s2166, 256
          %s2168 = scalar_lea.vmem [#allocation2], %s2167
          %2169 = dma.done %s2165, 4096
        $region44: #{tpu_custom_call.1} parent=39 // pred_fallthru
          _
      $region40: #{tpu_custom_call.1} parent=5 // pred_fallthru
        _
    $region6: #{tpu_custom_call.1} parent=1 // loop_footer
      %s16 = sadd.s32 1, %s12
    $region7: #{tpu_custom_call.1} parent=1 // loop_footer_branch
      %11 = sbr.rel target = $region3
    $region8: #{tpu_custom_call.1} parent=1 // loop_exit
      _
    %2170 = vsyncpa [#allocation3], 1
    %s2171 = scalar_lea.sflag [#allocation3], 1
    %2172 = vsyncpa %s2171, 1

</llo_original>
